<compile_context>
chip_gen: v6e
topology: v6e:2x2x1
jax: 0.10.0
libtpu: 0.0.40
codegen_flags: <defaults>
</compile_context>

<pallas_src>
import functools
import math

import jax
import jax.numpy as jnp
from jax.experimental import pallas as pl
from jax.experimental.pallas import tpu as pltpu


# MXU input dtype.  Weights are *stored* in this dtype in HBM (cast once in
# init_params); activations are cast at the matmul.  Set to jnp.float32 for
# bit-closer parity with the PyTorch reference.
MXU_DTYPE = jnp.bfloat16
# Attention-weights output dtype.  jnp.bfloat16 halves the (L,B,S,S) HBM
# writeback at long S; kept f32 here for parity with the reference.
ATTN_DTYPE = jnp.float32


# --------------------------------------------------------------------------
# Fused Pallas kernel: one grid step == one encoder layer on one batch block.
# --------------------------------------------------------------------------

def _encoder_stack_kernel(x_emb_ref, pe_ref, bias_ref, sel_ref,
                          wqkv_ref, bqkv_ref, wo_ref, bo_ref,
                          w1_ref, b1_ref, w2_ref, b2_ref,
                          g1_ref, be1_ref, g2_ref, be2_ref,
                          fcw_ref, fcb_ref,
                          logits_ref, attn_ref,
                          x_scr,
                          *, num_heads: int, eps: float = 1e-5):
    """Grid = (batch_block i, layer l).

    x_emb_ref:  (BB, S, D)      raw embedding lookups (unscaled, no PE)
    pe_ref:     (S, D)          sinusoidal positional encoding
    bias_ref:   (BB, 1, S)      additive key-padding bias (0 valid, -1e9 pad)
    sel_ref:    (BB, 1, S)      one-hot selector of the last real token
    w*_ref:     (1, ...)        weights of layer l only (streamed per step)
    fcw/fcb:    (D, Vp)/(1, Vp) FC head (vocab padded to 128 lanes)
    logits_ref: (BB, 1, Vp)     FC head output (written at l == L-1)
    attn_ref:   (1, BB, S, S)   head-averaged attention weights of layer l
    x_scr:      (BB, S, D) f32  activations carried across the layer axis
    """
    l = pl.program_id(1)
    num_l = pl.num_programs(1)
    BB, S, D = x_scr.shape
    H = num_heads
    hd = D // H
    M = BB * S

    def mm(a, w):
        # Activations cast to the MXU input dtype; weights already live in
        # MXU_DTYPE in HBM/VMEM -> no per-layer weight cast on the VPU.
        return jnp.dot(a.astype(MXU_DTYPE), w, preferred_element_type=jnp.float32)

    # ---- prologue (first layer only): embedding scale + positional encoding
    @pl.when(l == 0)
    def _():
        x_scr[...] = (x_emb_ref[...].astype(jnp.float32) * math.sqrt(float(D))
                      + pe_ref[...][None, :, :])

    x = x_scr[...].reshape(M, D)                                   # f32 (M, D)

    # ---- fused QKV projection: one (M, D) x (D, 3D) matmul ----------------
    qkv = mm(x, wqkv_ref[0]) + bqkv_ref[0]                         # (M, 3D) f32

    # ---- heads -> leading batch axis (lane slices + axis-0 concat; avoids
    #      sublane<->major transposes, which Mosaic does not lower) ---------
    def head_batch(base):
        parts = [qkv[:, base + h * hd: base + (h + 1) * hd].reshape(BB, S, hd)
                 for h in range(H)]
        return jnp.concatenate(parts, axis=0)                      # (H*BB, S, hd)

    q = head_batch(0)
    k = head_batch(D)
    v = head_batch(2 * D)

    # ---- scaled dot-product attention, one batched einsum over (head,batch)
    s = jnp.einsum('bqd,bkd->bqk', q.astype(MXU_DTYPE), k.astype(MXU_DTYPE),
                   preferred_element_type=jnp.float32)             # (H*BB, S, S)
    bias = bias_ref[...].astype(jnp.float32)                       # (BB, 1, S)
    s4 = s.reshape(H, BB, S, S) * (1.0 / math.sqrt(float(hd))) + bias[None]
    m_ = jnp.max(s4, axis=-1, keepdims=True)
    e_ = jnp.exp(s4 - m_)
    # Exact divide so the *returned* attention weights sum to 1 (torch parity).
    p4 = e_ / jnp.sum(e_, axis=-1, keepdims=True)                  # (H, BB, S, S)
    attn_ref[0] = jnp.mean(p4, axis=0).astype(attn_ref.dtype)      # head average

    p = p4.reshape(H * BB, S, S)
    ctx = jnp.einsum('bqk,bkd->bqd', p.astype(MXU_DTYPE), v.astype(MXU_DTYPE),
                     preferred_element_type=jnp.float32)           # (H*BB, S, hd)

    # Re-pack heads along lanes -> ONE K=D output projection on the MXU
    # (instead of H under-filled K=hd matmuls).
    ctx_md = jnp.concatenate(
        [ctx[h * BB:(h + 1) * BB].reshape(M, hd) for h in range(H)], axis=1)
    attn_out = mm(ctx_md, wo_ref[0]) + bo_ref[0]                   # (M, D)

    # ---- residual + LayerNorm 1 (dropout = identity at inference) ---------
    h1 = x + attn_out
    mu = jnp.mean(h1, axis=-1, keepdims=True)
    var = jnp.mean((h1 - mu) ** 2, axis=-1, keepdims=True)
    h1 = (h1 - mu) * jax.lax.rsqrt(var + eps) * g1_ref[0] + be1_ref[0]

    # ---- feed-forward (ReLU), all M = BB*S rows per matmul -----------------
    f = jnp.maximum(mm(h1, w1_ref[0]) + b1_ref[0], 0.0)
    f = mm(f, w2_ref[0]) + b2_ref[0]

    # ---- residual + LayerNorm 2 --------------------------------------------
    h2 = h1 + f
    mu2 = jnp.mean(h2, axis=-1, keepdims=True)
    var2 = jnp.mean((h2 - mu2) ** 2, axis=-1, keepdims=True)
    x_new = (h2 - mu2) * jax.lax.rsqrt(var2 + eps) * g2_ref[0] + be2_ref[0]

    x_scr[...] = x_new.reshape(BB, S, D)                           # carry to l+1

    # ---- epilogue (last layer only): last-token select + FC head ----------
    @pl.when(l == num_l - 1)
    def _():
        x_bsd = x_scr[...]                                         # (BB, S, D)
        sel = sel_ref[...].astype(MXU_DTYPE)                       # (BB, 1, S) one-hot
        # MXU contraction instead of a (BB,S,D) VPU multiply + sublane reduce.
        x_last = jnp.einsum('bqs,bsd->bqd', sel, x_bsd.astype(MXU_DTYPE),
                            preferred_element_type=jnp.float32)    # (BB, 1, D)
        logits = mm(x_last.reshape(BB, D), fcw_ref[...]) + fcb_ref[...]
        logits_ref[...] = logits[:, None, :].astype(logits_ref.dtype)


# --------------------------------------------------------------------------
# pallas_call wrapper
# --------------------------------------------------------------------------

def _pick_batch_block(B, S, target_rows=512):
    """Largest divisor of B with BB*S <= target_rows (keeps the per-step f32
    activation working set modest for v7x's 64 MiB VMEM), preferring >= 2
    programs on the 'parallel' batch axis so v7x megacore uses both cores."""
    divisors = [d for d in range(1, B + 1) if B % d == 0]
    good = [d for d in divisors if d * S <= target_rows] or [1]
    two_step = [d for d in good if B // d >= 2]
    return max(two_step) if two_step else max(good)


def fused_transformer_forward(x_emb, pe, attn_bias, last_sel, params, num_heads):
    B, S, D = x_emb.shape
    L = params["wqkv"].shape[0]
    Vp = params["fc_w"].shape[1]
    assert D % num_heads == 0

    BB = _pick_batch_block(B, S)
    grid = (B // BB, L)                         # (parallel batch, arbitrary layer)

    per_layer_names = ("wqkv", "bqkv", "wo", "bo", "w1", "b1", "w2", "b2",
                       "g1", "be1", "g2", "be2")
    weights = [params[k] for k in per_layer_names]

    def per_layer_spec(a):                      # stream one layer's slice per step
        zeros = (0,) * (a.ndim - 1)
        return pl.BlockSpec((1,) + tuple(a.shape[1:]),
                            lambda i, l, z=zeros: (l,) + z)

    def const_spec(a):                          # grid-invariant (small) inputs
        zeros = (0,) * a.ndim
        return pl.BlockSpec(tuple(a.shape), lambda i, l, z=zeros: z)

    in_specs = ([pl.BlockSpec((BB, S, D), lambda i, l: (i, 0, 0)),   # embeddings
                 const_spec(pe),                                      # (S, D)
                 pl.BlockSpec((BB, 1, S), lambda i, l: (i, 0, 0)),    # key-pad bias
                 pl.BlockSpec((BB, 1, S), lambda i, l: (i, 0, 0))]    # last-tok sel
                + [per_layer_spec(w) for w in weights]
                + [const_spec(params["fc_w"]), const_spec(params["fc_b"])])

    out_specs = [pl.BlockSpec((BB, 1, Vp), lambda i, l: (i, 0, 0)),   # logits
                 pl.BlockSpec((1, BB, S, S), lambda i, l: (l, i, 0, 0))]
    out_shapes = (jax.ShapeDtypeStruct((B, 1, Vp), jnp.float32),
                  jax.ShapeDtypeStruct((L, B, S, S), ATTN_DTYPE))

    kernel = functools.partial(_encoder_stack_kernel, num_heads=num_heads)

    logits, attn = pl.pallas_call(
        kernel,
        out_shape=out_shapes,
        grid_spec=pltpu.PrefetchScalarGridSpec(
            num_scalar_prefetch=0,
            grid=grid,
            in_specs=in_specs,
            out_specs=out_specs,
            scratch_shapes=[pltpu.VMEM((BB, S, D), jnp.float32)]),
        compiler_params=pltpu.CompilerParams(
            dimension_semantics=("parallel", "arbitrary"),
            # Explicit scoped-VMEM limit with headroom (<= physical on all of
            # v5e/v6e/v7x); the default (16/32 MiB) rejects realistic shapes.
            vmem_limit_bytes=48 * 1024 * 1024),
    )(x_emb, pe, attn_bias, last_sel, *weights, params["fc_w"], params["fc_b"])
    return logits, attn


# --------------------------------------------------------------------------
# Glue: parameters, positional encoding, full forward
# --------------------------------------------------------------------------

def sinusoidal_pe(S, D):
    pos = jnp.arange(S, dtype=jnp.float32)[:, None]
    div = jnp.exp(jnp.arange(0, D, 2, dtype=jnp.float32)
                  * (-math.log(10000.0) / D))
    pe = jnp.zeros((S, D), jnp.float32)
    pe = pe.at[:, 0::2].set(jnp.sin(pos * div))
    pe = pe.at[:, 1::2].set(jnp.cos(pos * div))
    return pe


def init_params(key, vocab, D, num_layers, F, init_range=(-0.1, 0.1)):
    keys = jax.random.split(key, 1 + num_layers)
    params = {}
    # embedding.weight ~ U(init_range[0], init_range[1])
    params["embedding"] = jax.random.uniform(
        keys[0], (vocab, D), jnp.float32, init_range[0], init_range[1])

    s = 0.05
    wq, wk, wv, wo, w1, w2 = [], [], [], [], [], []
    for l in range(num_layers):
        ks = jax.random.split(keys[1 + l], 6)
        wq.append(jax.random.normal(ks[0], (D, D), jnp.float32) * s)
        wk.append(jax.random.normal(ks[1], (D, D), jnp.float32) * s)
        wv.append(jax.random.normal(ks[2], (D, D), jnp.float32) * s)
        wo.append(jax.random.normal(ks[3], (D, D), jnp.float32) * s)
        w1.append(jax.random.normal(ks[4], (D, F), jnp.float32) * s)
        w2.append(jax.random.normal(ks[5], (F, D), jnp.float32) * s)

    # Per-layer weights stacked along a leading "layer" dim; Q/K/V fused.
    # Matmul weights are stored in MXU_DTYPE (bf16) in HBM: half the weight
    # DMA / VMEM, no per-layer cast in the kernel.  Biases / LayerNorm affine
    # params stay f32 (v5e-safe elementwise math).
    params["wqkv"] = jnp.concatenate(
        [jnp.stack(wq), jnp.stack(wk), jnp.stack(wv)], axis=-1).astype(MXU_DTYPE)
    params["bqkv"] = jnp.zeros((num_layers, 1, 3 * D), jnp.float32)
    params["wo"] = jnp.stack(wo).astype(MXU_DTYPE)
    params["bo"] = jnp.zeros((num_layers, 1, D), jnp.float32)
    params["w1"] = jnp.stack(w1).astype(MXU_DTYPE)
    params["b1"] = jnp.zeros((num_layers, 1, F), jnp.float32)
    params["w2"] = jnp.stack(w2).astype(MXU_DTYPE)
    params["b2"] = jnp.zeros((num_layers, 1, D), jnp.float32)
    params["g1"] = jnp.ones((num_layers, 1, D), jnp.float32)
    params["be1"] = jnp.zeros((num_layers, 1, D), jnp.float32)
    params["g2"] = jnp.ones((num_layers, 1, D), jnp.float32)
    params["be2"] = jnp.zeros((num_layers, 1, D), jnp.float32)

    # fc.weight.uniform_(-init_range[0], init_range[1]) with [-0.1, 0.1] is
    # literally uniform_(0.1, 0.1) == constant 0.1; bias zeroed.
    # Vocab is padded to a multiple of 128 for lane-dense stores; padded
    # columns are zero and sliced off in the wrapper.
    Vp = ((vocab + 127) // 128) * 128
    params["fc_w"] = (jnp.zeros((D, Vp), jnp.float32)
                      .at[:, :vocab].set(0.1).astype(MXU_DTYPE))
    params["fc_b"] = jnp.zeros((1, Vp), jnp.float32)
    return params


def transformer_forward(seq, inputs_mask, params, num_heads):
    """seq: (B, S) int32 token ids; inputs_mask: (B, S) bool, True = padded.

    Returns (logits (B, 1, input_size), [per-layer attention weights (B,S,S)]).
    """
    B, S = seq.shape
    V, D = params["embedding"].shape
    L = params["wqkv"].shape[0]

    # TODO(synk): embedding gather stays in XLA; an in-kernel scalar-prefetch
    # DMA gather is not worth it at this vocab/sequence size.
    x_emb = params["embedding"][seq]                               # (B, S, D)
    pe = sinusoidal_pe(S, D)                                       # (S, D)
    # TODO(synk): dropout in PositionalEncoder / encoder layers is identity
    # (eval / inference semantics).

    attn_bias = jnp.where(inputs_mask, jnp.float32(-1e9),
                          jnp.float32(0.0))[:, None, :]            # (B, 1, S)
    last_idx = jnp.sum(~inputs_mask, axis=1) - 1                   # (B,)
    last_sel = (jnp.arange(S)[None, :] == last_idx[:, None]
                ).astype(jnp.float32)[:, None, :]                  # (B, 1, S)

    logits_p, attn = fused_transformer_forward(
        x_emb, pe, attn_bias, last_sel, params, num_heads)

    logits = logits_p[:, :, :V]                                    # drop lane pad
    attn_ws = [attn[l] for l in range(L)]
    return logits, attn_ws


# --------------------------------------------------------------------------
# Demo
# --------------------------------------------------------------------------

if __name__ == "__main__":
    B, S = 2, 8                 # batch, seq_len
    VOCAB = 16                  # input_size
    D = 32                      # model_size
    F = 64                      # dim_feedforward
    H = 2                       # num_heads
    L = 2                       # num_layers

    key = jax.random.PRNGKey(0)
    pkey, skey = jax.random.split(key)

    params = init_params(pkey, VOCAB, D, L, F)

    seq = jax.random.randint(skey, (B, S), 0, VOCAB, dtype=jnp.int32)
    lengths = jnp.array([8, 6], dtype=jnp.int32)               # real lengths
    inputs_mask = jnp.arange(S)[None, :] >= lengths[:, None]   # True = padded

    out, attn_ws = transformer_forward(seq, inputs_mask, params, H)
    out = jax.block_until_ready(out)
    for w in attn_ws:
        jax.block_until_ready(w)

    assert out.shape == (B, 1, VOCAB), out.shape
    assert all(w.shape == (B, S, S) for w in attn_ws)
    print("KERNEL_OK")
</pallas_src>

<mosaic_0001>
module attributes {stable_mosaic.version = 11 : i64} {
  func.func @_encoder_stack_kernel(%arg0: i32, %arg1: i32, %arg2: memref<1x8x32xf32, #tpu.memory_space<vmem>>, %arg3: memref<8x32xf32, #tpu.memory_space<vmem>>, %arg4: memref<1x1x8xf32, #tpu.memory_space<vmem>>, %arg5: memref<1x1x8xf32, #tpu.memory_space<vmem>>, %arg6: memref<1x32x96xbf16, #tpu.memory_space<vmem>>, %arg7: memref<1x1x96xf32, #tpu.memory_space<vmem>>, %arg8: memref<1x32x32xbf16, #tpu.memory_space<vmem>>, %arg9: memref<1x1x32xf32, #tpu.memory_space<vmem>>, %arg10: memref<1x32x64xbf16, #tpu.memory_space<vmem>>, %arg11: memref<1x1x64xf32, #tpu.memory_space<vmem>>, %arg12: memref<1x64x32xbf16, #tpu.memory_space<vmem>>, %arg13: memref<1x1x32xf32, #tpu.memory_space<vmem>>, %arg14: memref<1x1x32xf32, #tpu.memory_space<vmem>>, %arg15: memref<1x1x32xf32, #tpu.memory_space<vmem>>, %arg16: memref<1x1x32xf32, #tpu.memory_space<vmem>>, %arg17: memref<1x1x32xf32, #tpu.memory_space<vmem>>, %arg18: memref<32x128xbf16, #tpu.memory_space<vmem>>, %arg19: memref<1x128xf32, #tpu.memory_space<vmem>>, %arg20: memref<1x1x128xf32, #tpu.memory_space<vmem>>, %arg21: memref<1x1x8x8xf32, #tpu.memory_space<vmem>>, %arg22: memref<1x8x32xf32, #tpu.memory_space<vmem>>) attributes {dimension_semantics = [#tpu.dimension_semantics<parallel>, #tpu.dimension_semantics<arbitrary>], iteration_bounds = array<i64: 2, 2>, scalar_prefetch = 0 : i64, scratch_operands = 1 : i64, tpu.core_type = #tpu.core_type<tc>, window_params = [{transform_indices = @transform_0, window_bounds = array<i64: 1, 8, 32>}, {pipeline_mode = #tpu.pipeline_mode<synchronous>, transform_indices = @transform_1, window_bounds = array<i64: 8, 32>}, {transform_indices = @transform_2, window_bounds = array<i64: 1, 1, 8>}, {transform_indices = @transform_3, window_bounds = array<i64: 1, 1, 8>}, {transform_indices = @transform_4, window_bounds = array<i64: 1, 32, 96>}, {transform_indices = @transform_5, window_bounds = array<i64: 1, 1, 96>}, {transform_indices = @transform_6, window_bounds = array<i64: 1, 32, 32>}, {transform_indices = @transform_7, window_bounds = array<i64: 1, 1, 32>}, {transform_indices = @transform_8, window_bounds = array<i64: 1, 32, 64>}, {transform_indices = @transform_9, window_bounds = array<i64: 1, 1, 64>}, {transform_indices = @transform_10, window_bounds = array<i64: 1, 64, 32>}, {transform_indices = @transform_11, window_bounds = array<i64: 1, 1, 32>}, {transform_indices = @transform_12, window_bounds = array<i64: 1, 1, 32>}, {transform_indices = @transform_13, window_bounds = array<i64: 1, 1, 32>}, {transform_indices = @transform_14, window_bounds = array<i64: 1, 1, 32>}, {transform_indices = @transform_15, window_bounds = array<i64: 1, 1, 32>}, {pipeline_mode = #tpu.pipeline_mode<synchronous>, transform_indices = @transform_16, window_bounds = array<i64: 32, 128>}, {pipeline_mode = #tpu.pipeline_mode<synchronous>, transform_indices = @transform_17, window_bounds = array<i64: 1, 128>}, {transform_indices = @transform_18, window_bounds = array<i64: 1, 1, 128>}, {transform_indices = @transform_19, window_bounds = array<i64: 1, 1, 8, 8>}]} {
    %c0_i32 = arith.constant 0 : i32
    %0 = arith.cmpi eq, %arg1, %c0_i32 : i32
    %1 = arith.extui %0 : i1 to i32
    %c0_i32_0 = arith.constant 0 : i32
    %2 = arith.cmpi ne, %1, %c0_i32_0 : i32
    scf.if %2 {
      %c0_71 = arith.constant 0 : index
      %c0_72 = arith.constant 0 : index
      %c0_73 = arith.constant 0 : index
      %147 = vector.load %arg2[%c0_71, %c0_72, %c0_73] : memref<1x8x32xf32, #tpu.memory_space<vmem>>, vector<1x8x32xf32>
      %cst_74 = arith.constant 5.65685415 : f32
      %148 = vector.broadcast %cst_74 : f32 to vector<1x8x32xf32>
      %149 = arith.mulf %147, %148 : vector<1x8x32xf32>
      %c0_75 = arith.constant 0 : index
      %c0_76 = arith.constant 0 : index
      %150 = vector.load %arg3[%c0_75, %c0_76] : memref<8x32xf32, #tpu.memory_space<vmem>>, vector<8x32xf32>
      %151 = vector.shape_cast %150 : vector<8x32xf32> to vector<1x8x32xf32>
      %152 = arith.addf %149, %151 : vector<1x8x32xf32>
      %c0_77 = arith.constant 0 : index
      %c0_78 = arith.constant 0 : index
      %c0_79 = arith.constant 0 : index
      %153 = vector.load %arg22[%c0_77, %c0_78, %c0_79] : memref<1x8x32xf32, #tpu.memory_space<vmem>>, vector<1x8x32xf32>
      tpu.vector_store %arg22[%c0_77, %c0_78, %c0_79], %152 {strides = array<i32>} : memref<1x8x32xf32, #tpu.memory_space<vmem>>, vector<1x8x32xf32>,
    } else {
    }
    %c0 = arith.constant 0 : index
    %c0_1 = arith.constant 0 : index
    %c0_2 = arith.constant 0 : index
    %3 = vector.load %arg22[%c0, %c0_1, %c0_2] : memref<1x8x32xf32, #tpu.memory_space<vmem>>, vector<1x8x32xf32>
    %4 = vector.shape_cast %3 : vector<1x8x32xf32> to vector<8x32xf32>
    %c0_3 = arith.constant 0 : index
    %c0_4 = arith.constant 0 : index
    %c0_5 = arith.constant 0 : index
    %5 = vector.load %arg6[%c0_3, %c0_4, %c0_5] : memref<1x32x96xbf16, #tpu.memory_space<vmem>>, vector<1x32x96xbf16>
    %6 = vector.shape_cast %5 : vector<1x32x96xbf16> to vector<32x96xbf16>
    %7 = arith.truncf %4 : vector<8x32xf32> to vector<8x32xbf16>
    %cst = arith.constant dense<0.000000e+00> : vector<8x96xf32>
    %8 = tpu.matmul %7, %6, %cst {dimension_numbers = #tpu.dot_dimension_numbers<[1], [0], [0], [1], [0, 0, 1, 1], [], []>} : vector<8x32xbf16>, vector<32x96xbf16>, vector<8x96xf32> -> vector<8x96xf32>
    %c0_6 = arith.constant 0 : index
    %c0_7 = arith.constant 0 : index
    %c0_8 = arith.constant 0 : index
    %9 = vector.load %arg7[%c0_6, %c0_7, %c0_8] : memref<1x1x96xf32, #tpu.memory_space<vmem>>, vector<1x1x96xf32>
    %10 = vector.shape_cast %9 : vector<1x1x96xf32> to vector<1x96xf32>
    %11 = vector.broadcast %10 : vector<1x96xf32> to vector<8x96xf32>
    %12 = arith.addf %8, %11 : vector<8x96xf32>
    %13 = vector.extract_strided_slice %12 {offsets = [0, 0], sizes = [8, 16], strides = [1, 1]} : vector<8x96xf32> to vector<8x16xf32>
    %14 = vector.shape_cast %13 : vector<8x16xf32> to vector<1x8x16xf32>
    %15 = vector.extract_strided_slice %12 {offsets = [0, 16], sizes = [8, 16], strides = [1, 1]} : vector<8x96xf32> to vector<8x16xf32>
    %16 = vector.shape_cast %15 : vector<8x16xf32> to vector<1x8x16xf32>
    %17 = tpu.concatenate %14, %16 in 0 : vector<1x8x16xf32>, vector<1x8x16xf32> -> vector<2x8x16xf32>
    %18 = vector.extract_strided_slice %12 {offsets = [0, 32], sizes = [8, 16], strides = [1, 1]} : vector<8x96xf32> to vector<8x16xf32>
    %19 = vector.shape_cast %18 : vector<8x16xf32> to vector<1x8x16xf32>
    %20 = vector.extract_strided_slice %12 {offsets = [0, 48], sizes = [8, 16], strides = [1, 1]} : vector<8x96xf32> to vector<8x16xf32>
    %21 = vector.shape_cast %20 : vector<8x16xf32> to vector<1x8x16xf32>
    %22 = tpu.concatenate %19, %21 in 0 : vector<1x8x16xf32>, vector<1x8x16xf32> -> vector<2x8x16xf32>
    %23 = vector.extract_strided_slice %12 {offsets = [0, 64], sizes = [8, 16], strides = [1, 1]} : vector<8x96xf32> to vector<8x16xf32>
    %24 = vector.shape_cast %23 : vector<8x16xf32> to vector<1x8x16xf32>
    %25 = vector.extract_strided_slice %12 {offsets = [0, 80], sizes = [8, 16], strides = [1, 1]} : vector<8x96xf32> to vector<8x16xf32>
    %26 = vector.shape_cast %25 : vector<8x16xf32> to vector<1x8x16xf32>
    %27 = tpu.concatenate %24, %26 in 0 : vector<1x8x16xf32>, vector<1x8x16xf32> -> vector<2x8x16xf32>
    %28 = arith.truncf %17 : vector<2x8x16xf32> to vector<2x8x16xbf16>
    %29 = arith.truncf %22 : vector<2x8x16xf32> to vector<2x8x16xbf16>
    "tpu.trace_start"() <{level = 10 : i32, message = "bqd,bkd->bqk"}> : () -> ()
    %cst_9 = arith.constant dense<0.000000e+00> : vector<2x8x8xf32>
    %30 = tpu.matmul %28, %29, %cst_9 {dimension_numbers = #tpu.dot_dimension_numbers<[2], [2], [1], [1], [0, 0, 0, 1, 1, 1], [0], [0]>} : vector<2x8x16xbf16>, vector<2x8x16xbf16>, vector<2x8x8xf32> -> vector<2x8x8xf32>
    "tpu.trace_stop"() : () -> ()
    %c0_10 = arith.constant 0 : index
    %c0_11 = arith.constant 0 : index
    %c0_12 = arith.constant 0 : index
    %31 = vector.load %arg4[%c0_10, %c0_11, %c0_12] : memref<1x1x8xf32, #tpu.memory_space<vmem>>, vector<1x1x8xf32>
    %32 = vector.shape_cast %30 : vector<2x8x8xf32> to vector<2x1x8x8xf32>
    %cst_13 = arith.constant 2.500000e-01 : f32
    %33 = vector.broadcast %cst_13 : f32 to vector<2x1x8x8xf32>
    %34 = arith.mulf %32, %33 : vector<2x1x8x8xf32>
    %35 = vector.shape_cast %31 : vector<1x1x8xf32> to vector<1x1x1x8xf32>
    %36 = vector.broadcast %35 : vector<1x1x1x8xf32> to vector<2x1x8x8xf32>
    %37 = arith.addf %34, %36 : vector<2x1x8x8xf32>
    %cst_14 = arith.constant dense<0xFF800000> : vector<2x1x8xf32>
    %38 = vector.multi_reduction <maximumf>, %37, %cst_14 [3] : vector<2x1x8x8xf32> to vector<2x1x8xf32>
    %39 = vector.shape_cast %38 : vector<2x1x8xf32> to vector<2x1x8x1xf32>
    %40 = vector.broadcast %39 : vector<2x1x8x1xf32> to vector<2x1x8x8xf32>
    %41 = arith.subf %37, %40 : vector<2x1x8x8xf32>
    %42 = math.exp %41 : vector<2x1x8x8xf32>
    %cst_15 = arith.constant dense<0.000000e+00> : vector<2x1x8xf32>
    %43 = vector.multi_reduction <add>, %42, %cst_15 [3] : vector<2x1x8x8xf32> to vector<2x1x8xf32>
    %44 = vector.shape_cast %43 : vector<2x1x8xf32> to vector<2x1x8x1xf32>
    %45 = vector.broadcast %44 : vector<2x1x8x1xf32> to vector<2x1x8x8xf32>
    %46 = arith.divf %42, %45 : vector<2x1x8x8xf32>
    %cst_16 = arith.constant dense<0.000000e+00> : vector<1x8x8xf32>
    %47 = vector.multi_reduction <add>, %46, %cst_16 [0] : vector<2x1x8x8xf32> to vector<1x8x8xf32>
    %cst_17 = arith.constant 2.000000e+00 : f32
    %48 = vector.broadcast %cst_17 : f32 to vector<1x8x8xf32>
    %49 = arith.divf %47, %48 : vector<1x8x8xf32>
    %c0_18 = arith.constant 0 : index
    %c0_19 = arith.constant 0 : index
    %c0_20 = arith.constant 0 : index
    %c0_21 = arith.constant 0 : index
    %50 = vector.load %arg21[%c0_18, %c0_19, %c0_20, %c0_21] : memref<1x1x8x8xf32, #tpu.memory_space<vmem>>, vector<1x1x8x8xf32>
    %51 = vector.shape_cast %50 : vector<1x1x8x8xf32> to vector<1x8x8xf32>
    %52 = vector.shape_cast %49 : vector<1x8x8xf32> to vector<1x1x8x8xf32>
    tpu.vector_store %arg21[%c0_18, %c0_19, %c0_20, %c0_21], %52 {strides = array<i32>} : memref<1x1x8x8xf32, #tpu.memory_space<vmem>>, vector<1x1x8x8xf32>,
    %53 = vector.shape_cast %46 : vector<2x1x8x8xf32> to vector<2x8x8xf32>
    %54 = arith.truncf %53 : vector<2x8x8xf32> to vector<2x8x8xbf16>
    %55 = arith.truncf %27 : vector<2x8x16xf32> to vector<2x8x16xbf16>
    "tpu.trace_start"() <{level = 10 : i32, message = "bqk,bkd->bqd"}> : () -> ()
    %cst_22 = arith.constant dense<0.000000e+00> : vector<2x8x16xf32>
    %56 = tpu.matmul %54, %55, %cst_22 {dimension_numbers = #tpu.dot_dimension_numbers<[2], [1], [1], [2], [0, 0, 0, 1, 1, 2], [0], [0]>} : vector<2x8x8xbf16>, vector<2x8x16xbf16>, vector<2x8x16xf32> -> vector<2x8x16xf32>
    "tpu.trace_stop"() : () -> ()
    %57 = vector.extract_strided_slice %56 {offsets = [0, 0, 0], sizes = [1, 8, 16], strides = [1, 1, 1]} : vector<2x8x16xf32> to vector<1x8x16xf32>
    %58 = vector.shape_cast %57 : vector<1x8x16xf32> to vector<8x16xf32>
    %59 = vector.extract_strided_slice %56 {offsets = [1, 0, 0], sizes = [1, 8, 16], strides = [1, 1, 1]} : vector<2x8x16xf32> to vector<1x8x16xf32>
    %60 = vector.shape_cast %59 : vector<1x8x16xf32> to vector<8x16xf32>
    %61 = tpu.concatenate %58, %60 in 1 : vector<8x16xf32>, vector<8x16xf32> -> vector<8x32xf32>
    %c0_23 = arith.constant 0 : index
    %c0_24 = arith.constant 0 : index
    %c0_25 = arith.constant 0 : index
    %62 = vector.load %arg8[%c0_23, %c0_24, %c0_25] : memref<1x32x32xbf16, #tpu.memory_space<vmem>>, vector<1x32x32xbf16>
    %63 = vector.shape_cast %62 : vector<1x32x32xbf16> to vector<32x32xbf16>
    %64 = arith.truncf %61 : vector<8x32xf32> to vector<8x32xbf16>
    %cst_26 = arith.constant dense<0.000000e+00> : vector<8x32xf32>
    %65 = tpu.matmul %64, %63, %cst_26 {dimension_numbers = #tpu.dot_dimension_numbers<[1], [0], [0], [1], [0, 0, 1, 1], [], []>} : vector<8x32xbf16>, vector<32x32xbf16>, vector<8x32xf32> -> vector<8x32xf32>
    %c0_27 = arith.constant 0 : index
    %c0_28 = arith.constant 0 : index
    %c0_29 = arith.constant 0 : index
    %66 = vector.load %arg9[%c0_27, %c0_28, %c0_29] : memref<1x1x32xf32, #tpu.memory_space<vmem>>, vector<1x1x32xf32>
    %67 = vector.shape_cast %66 : vector<1x1x32xf32> to vector<1x32xf32>
    %68 = vector.broadcast %67 : vector<1x32xf32> to vector<8x32xf32>
    %69 = arith.addf %65, %68 : vector<8x32xf32>
    %70 = arith.addf %4, %69 : vector<8x32xf32>
    %cst_30 = arith.constant dense<0.000000e+00> : vector<8xf32>
    %71 = vector.multi_reduction <add>, %70, %cst_30 [1] : vector<8x32xf32> to vector<8xf32>
    %72 = vector.shape_cast %71 : vector<8xf32> to vector<8x1xf32>
    %cst_31 = arith.constant 3.200000e+01 : f32
    %73 = vector.broadcast %cst_31 : f32 to vector<8x1xf32>
    %74 = arith.divf %72, %73 : vector<8x1xf32>
    %75 = vector.broadcast %74 : vector<8x1xf32> to vector<8x32xf32>
    %76 = arith.subf %70, %75 : vector<8x32xf32>
    %77 = arith.mulf %76, %76 : vector<8x32xf32>
    %cst_32 = arith.constant dense<0.000000e+00> : vector<8xf32>
    %78 = vector.multi_reduction <add>, %77, %cst_32 [1] : vector<8x32xf32> to vector<8xf32>
    %79 = vector.shape_cast %78 : vector<8xf32> to vector<8x1xf32>
    %cst_33 = arith.constant 3.200000e+01 : f32
    %80 = vector.broadcast %cst_33 : f32 to vector<8x1xf32>
    %81 = arith.divf %79, %80 : vector<8x1xf32>
    %82 = vector.broadcast %74 : vector<8x1xf32> to vector<8x32xf32>
    %83 = arith.subf %70, %82 : vector<8x32xf32>
    %cst_34 = arith.constant 9.99999974E-6 : f32
    %84 = vector.broadcast %cst_34 : f32 to vector<8x1xf32>
    %85 = arith.addf %81, %84 : vector<8x1xf32>
    %86 = math.rsqrt %85 : vector<8x1xf32>
    %87 = vector.broadcast %86 : vector<8x1xf32> to vector<8x32xf32>
    %88 = arith.mulf %83, %87 : vector<8x32xf32>
    %c0_35 = arith.constant 0 : index
    %c0_36 = arith.constant 0 : index
    %c0_37 = arith.constant 0 : index
    %89 = vector.load %arg14[%c0_35, %c0_36, %c0_37] : memref<1x1x32xf32, #tpu.memory_space<vmem>>, vector<1x1x32xf32>
    %90 = vector.shape_cast %89 : vector<1x1x32xf32> to vector<1x32xf32>
    %91 = vector.broadcast %90 : vector<1x32xf32> to vector<8x32xf32>
    %92 = arith.mulf %88, %91 : vector<8x32xf32>
    %c0_38 = arith.constant 0 : index
    %c0_39 = arith.constant 0 : index
    %c0_40 = arith.constant 0 : index
    %93 = vector.load %arg15[%c0_38, %c0_39, %c0_40] : memref<1x1x32xf32, #tpu.memory_space<vmem>>, vector<1x1x32xf32>
    %94 = vector.shape_cast %93 : vector<1x1x32xf32> to vector<1x32xf32>
    %95 = vector.broadcast %94 : vector<1x32xf32> to vector<8x32xf32>
    %96 = arith.addf %92, %95 : vector<8x32xf32>
    %c0_41 = arith.constant 0 : index
    %c0_42 = arith.constant 0 : index
    %c0_43 = arith.constant 0 : index
    %97 = vector.load %arg10[%c0_41, %c0_42, %c0_43] : memref<1x32x64xbf16, #tpu.memory_space<vmem>>, vector<1x32x64xbf16>
    %98 = vector.shape_cast %97 : vector<1x32x64xbf16> to vector<32x64xbf16>
    %99 = arith.truncf %96 : vector<8x32xf32> to vector<8x32xbf16>
    %cst_44 = arith.constant dense<0.000000e+00> : vector<8x64xf32>
    %100 = tpu.matmul %99, %98, %cst_44 {dimension_numbers = #tpu.dot_dimension_numbers<[1], [0], [0], [1], [0, 0, 1, 1], [], []>} : vector<8x32xbf16>, vector<32x64xbf16>, vector<8x64xf32> -> vector<8x64xf32>
    %c0_45 = arith.constant 0 : index
    %c0_46 = arith.constant 0 : index
    %c0_47 = arith.constant 0 : index
    %101 = vector.load %arg11[%c0_45, %c0_46, %c0_47] : memref<1x1x64xf32, #tpu.memory_space<vmem>>, vector<1x1x64xf32>
    %102 = vector.shape_cast %101 : vector<1x1x64xf32> to vector<1x64xf32>
    %103 = vector.broadcast %102 : vector<1x64xf32> to vector<8x64xf32>
    %104 = arith.addf %100, %103 : vector<8x64xf32>
    %cst_48 = arith.constant 0.000000e+00 : f32
    %105 = vector.broadcast %cst_48 : f32 to vector<8x64xf32>
    %106 = arith.maximumf %104, %105 : vector<8x64xf32>
    %c0_49 = arith.constant 0 : index
    %c0_50 = arith.constant 0 : index
    %c0_51 = arith.constant 0 : index
    %107 = vector.load %arg12[%c0_49, %c0_50, %c0_51] : memref<1x64x32xbf16, #tpu.memory_space<vmem>>, vector<1x64x32xbf16>
    %108 = vector.shape_cast %107 : vector<1x64x32xbf16> to vector<64x32xbf16>
    %109 = arith.truncf %106 : vector<8x64xf32> to vector<8x64xbf16>
    %cst_52 = arith.constant dense<0.000000e+00> : vector<8x32xf32>
    %110 = tpu.matmul %109, %108, %cst_52 {dimension_numbers = #tpu.dot_dimension_numbers<[1], [0], [0], [1], [0, 0, 1, 1], [], []>} : vector<8x64xbf16>, vector<64x32xbf16>, vector<8x32xf32> -> vector<8x32xf32>
    %c0_53 = arith.constant 0 : index
    %c0_54 = arith.constant 0 : index
    %c0_55 = arith.constant 0 : index
    %111 = vector.load %arg13[%c0_53, %c0_54, %c0_55] : memref<1x1x32xf32, #tpu.memory_space<vmem>>, vector<1x1x32xf32>
    %112 = vector.shape_cast %111 : vector<1x1x32xf32> to vector<1x32xf32>
    %113 = vector.broadcast %112 : vector<1x32xf32> to vector<8x32xf32>
    %114 = arith.addf %110, %113 : vector<8x32xf32>
    %115 = arith.addf %96, %114 : vector<8x32xf32>
    %cst_56 = arith.constant dense<0.000000e+00> : vector<8xf32>
    %116 = vector.multi_reduction <add>, %115, %cst_56 [1] : vector<8x32xf32> to vector<8xf32>
    %117 = vector.shape_cast %116 : vector<8xf32> to vector<8x1xf32>
    %cst_57 = arith.constant 3.200000e+01 : f32
    %118 = vector.broadcast %cst_57 : f32 to vector<8x1xf32>
    %119 = arith.divf %117, %118 : vector<8x1xf32>
    %120 = vector.broadcast %119 : vector<8x1xf32> to vector<8x32xf32>
    %121 = arith.subf %115, %120 : vector<8x32xf32>
    %122 = arith.mulf %121, %121 : vector<8x32xf32>
    %cst_58 = arith.constant dense<0.000000e+00> : vector<8xf32>
    %123 = vector.multi_reduction <add>, %122, %cst_58 [1] : vector<8x32xf32> to vector<8xf32>
    %124 = vector.shape_cast %123 : vector<8xf32> to vector<8x1xf32>
    %cst_59 = arith.constant 3.200000e+01 : f32
    %125 = vector.broadcast %cst_59 : f32 to vector<8x1xf32>
    %126 = arith.divf %124, %125 : vector<8x1xf32>
    %127 = vector.broadcast %119 : vector<8x1xf32> to vector<8x32xf32>
    %128 = arith.subf %115, %127 : vector<8x32xf32>
    %cst_60 = arith.constant 9.99999974E-6 : f32
    %129 = vector.broadcast %cst_60 : f32 to vector<8x1xf32>
    %130 = arith.addf %126, %129 : vector<8x1xf32>
    %131 = math.rsqrt %130 : vector<8x1xf32>
    %132 = vector.broadcast %131 : vector<8x1xf32> to vector<8x32xf32>
    %133 = arith.mulf %128, %132 : vector<8x32xf32>
    %c0_61 = arith.constant 0 : index
    %c0_62 = arith.constant 0 : index
    %c0_63 = arith.constant 0 : index
    %134 = vector.load %arg16[%c0_61, %c0_62, %c0_63] : memref<1x1x32xf32, #tpu.memory_space<vmem>>, vector<1x1x32xf32>
    %135 = vector.shape_cast %134 : vector<1x1x32xf32> to vector<1x32xf32>
    %136 = vector.broadcast %135 : vector<1x32xf32> to vector<8x32xf32>
    %137 = arith.mulf %133, %136 : vector<8x32xf32>
    %c0_64 = arith.constant 0 : index
    %c0_65 = arith.constant 0 : index
    %c0_66 = arith.constant 0 : index
    %138 = vector.load %arg17[%c0_64, %c0_65, %c0_66] : memref<1x1x32xf32, #tpu.memory_space<vmem>>, vector<1x1x32xf32>
    %139 = vector.shape_cast %138 : vector<1x1x32xf32> to vector<1x32xf32>
    %140 = vector.broadcast %139 : vector<1x32xf32> to vector<8x32xf32>
    %141 = arith.addf %137, %140 : vector<8x32xf32>
    %142 = vector.shape_cast %141 : vector<8x32xf32> to vector<1x8x32xf32>
    %c0_67 = arith.constant 0 : index
    %c0_68 = arith.constant 0 : index
    %c0_69 = arith.constant 0 : index
    %143 = vector.load %arg22[%c0_67, %c0_68, %c0_69] : memref<1x8x32xf32, #tpu.memory_space<vmem>>, vector<1x8x32xf32>
    tpu.vector_store %arg22[%c0_67, %c0_68, %c0_69], %142 {strides = array<i32>} : memref<1x8x32xf32, #tpu.memory_space<vmem>>, vector<1x8x32xf32>,
    %c1_i32 = arith.constant 1 : i32
    %144 = arith.cmpi eq, %arg1, %c1_i32 : i32
    %145 = arith.extui %144 : i1 to i32
    %c0_i32_70 = arith.constant 0 : i32
    %146 = arith.cmpi ne, %145, %c0_i32_70 : i32
    scf.if %146 {
      %c0_71 = arith.constant 0 : index
      %c0_72 = arith.constant 0 : index
      %c0_73 = arith.constant 0 : index
      %147 = vector.load %arg22[%c0_71, %c0_72, %c0_73] : memref<1x8x32xf32, #tpu.memory_space<vmem>>, vector<1x8x32xf32>
      %c0_74 = arith.constant 0 : index
      %c0_75 = arith.constant 0 : index
      %c0_76 = arith.constant 0 : index
      %148 = vector.load %arg5[%c0_74, %c0_75, %c0_76] : memref<1x1x8xf32, #tpu.memory_space<vmem>>, vector<1x1x8xf32>
      %149 = arith.truncf %148 : vector<1x1x8xf32> to vector<1x1x8xbf16>
      %150 = arith.truncf %147 : vector<1x8x32xf32> to vector<1x8x32xbf16>
      "tpu.trace_start"() <{level = 10 : i32, message = "bqs,bsd->bqd"}> : () -> ()
      %cst_77 = arith.constant dense<0.000000e+00> : vector<1x1x32xf32>
      %151 = tpu.matmul %149, %150, %cst_77 {dimension_numbers = #tpu.dot_dimension_numbers<[2], [1], [1], [2], [0, 0, 0, 1, 1, 2], [0], [0]>} : vector<1x1x8xbf16>, vector<1x8x32xbf16>, vector<1x1x32xf32> -> vector<1x1x32xf32>
      "tpu.trace_stop"() : () -> ()
      %152 = vector.shape_cast %151 : vector<1x1x32xf32> to vector<1x32xf32>
      %c0_78 = arith.constant 0 : index
      %c0_79 = arith.constant 0 : index
      %153 = vector.load %arg18[%c0_78, %c0_79] : memref<32x128xbf16, #tpu.memory_space<vmem>>, vector<32x128xbf16>
      %154 = arith.truncf %152 : vector<1x32xf32> to vector<1x32xbf16>
      %cst_80 = arith.constant dense<0.000000e+00> : vector<1x128xf32>
      %155 = tpu.matmul %154, %153, %cst_80 {dimension_numbers = #tpu.dot_dimension_numbers<[1], [0], [0], [1], [0, 0, 1, 1], [], []>} : vector<1x32xbf16>, vector<32x128xbf16>, vector<1x128xf32> -> vector<1x128xf32>
      %c0_81 = arith.constant 0 : index
      %c0_82 = arith.constant 0 : index
      %156 = vector.load %arg19[%c0_81, %c0_82] : memref<1x128xf32, #tpu.memory_space<vmem>>, vector<1x128xf32>
      %157 = arith.addf %155, %156 : vector<1x128xf32>
      %158 = vector.shape_cast %157 : vector<1x128xf32> to vector<1x1x128xf32>
      %c0_83 = arith.constant 0 : index
      %c0_84 = arith.constant 0 : index
      %c0_85 = arith.constant 0 : index
      %159 = vector.load %arg20[%c0_83, %c0_84, %c0_85] : memref<1x1x128xf32, #tpu.memory_space<vmem>>, vector<1x1x128xf32>
      tpu.vector_store %arg20[%c0_83, %c0_84, %c0_85], %158 {strides = array<i32>} : memref<1x1x128xf32, #tpu.memory_space<vmem>>, vector<1x1x128xf32>,
    } else {
    }
    return
  }
  func.func @transform_0(%arg0: i32, %arg1: i32) -> (i32, i32, i32) {
    %c0_i32 = arith.constant 0 : i32
    %c0_i32_0 = arith.constant 0 : i32
    %c0_i32_1 = arith.constant 0 : i32
    return %arg0, %c0_i32, %c0_i32_0 : i32, i32, i32
  }
  func.func @transform_1(%arg0: i32, %arg1: i32) -> (i32, i32) {
    %c0_i32 = arith.constant 0 : i32
    %c0_i32_0 = arith.constant 0 : i32
    %c0_i32_1 = arith.constant 0 : i32
    return %c0_i32, %c0_i32_0 : i32, i32
  }
  func.func @transform_2(%arg0: i32, %arg1: i32) -> (i32, i32, i32) {
    %c0_i32 = arith.constant 0 : i32
    %c0_i32_0 = arith.constant 0 : i32
    %c0_i32_1 = arith.constant 0 : i32
    return %arg0, %c0_i32, %c0_i32_0 : i32, i32, i32
  }
  func.func @transform_3(%arg0: i32, %arg1: i32) -> (i32, i32, i32) {
    %c0_i32 = arith.constant 0 : i32
    %c0_i32_0 = arith.constant 0 : i32
    %c0_i32_1 = arith.constant 0 : i32
    return %arg0, %c0_i32, %c0_i32_0 : i32, i32, i32
  }
  func.func @transform_4(%arg0: i32, %arg1: i32) -> (i32, i32, i32) {
    %c0_i32 = arith.constant 0 : i32
    %c0_i32_0 = arith.constant 0 : i32
    %c0_i32_1 = arith.constant 0 : i32
    return %arg1, %c0_i32, %c0_i32_0 : i32, i32, i32
  }
  func.func @transform_5(%arg0: i32, %arg1: i32) -> (i32, i32, i32) {
    %c0_i32 = arith.constant 0 : i32
    %c0_i32_0 = arith.constant 0 : i32
    %c0_i32_1 = arith.constant 0 : i32
    return %arg1, %c0_i32, %c0_i32_0 : i32, i32, i32
  }
  func.func @transform_6(%arg0: i32, %arg1: i32) -> (i32, i32, i32) {
    %c0_i32 = arith.constant 0 : i32
    %c0_i32_0 = arith.constant 0 : i32
    %c0_i32_1 = arith.constant 0 : i32
    return %arg1, %c0_i32, %c0_i32_0 : i32, i32, i32
  }
  func.func @transform_7(%arg0: i32, %arg1: i32) -> (i32, i32, i32) {
    %c0_i32 = arith.constant 0 : i32
    %c0_i32_0 = arith.constant 0 : i32
    %c0_i32_1 = arith.constant 0 : i32
    return %arg1, %c0_i32, %c0_i32_0 : i32, i32, i32
  }
  func.func @transform_8(%arg0: i32, %arg1: i32) -> (i32, i32, i32) {
    %c0_i32 = arith.constant 0 : i32
    %c0_i32_0 = arith.constant 0 : i32
    %c0_i32_1 = arith.constant 0 : i32
    return %arg1, %c0_i32, %c0_i32_0 : i32, i32, i32
  }
  func.func @transform_9(%arg0: i32, %arg1: i32) -> (i32, i32, i32) {
    %c0_i32 = arith.constant 0 : i32
    %c0_i32_0 = arith.constant 0 : i32
    %c0_i32_1 = arith.constant 0 : i32
    return %arg1, %c0_i32, %c0_i32_0 : i32, i32, i32
  }
  func.func @transform_10(%arg0: i32, %arg1: i32) -> (i32, i32, i32) {
    %c0_i32 = arith.constant 0 : i32
    %c0_i32_0 = arith.constant 0 : i32
    %c0_i32_1 = arith.constant 0 : i32
    return %arg1, %c0_i32, %c0_i32_0 : i32, i32, i32
  }
  func.func @transform_11(%arg0: i32, %arg1: i32) -> (i32, i32, i32) {
    %c0_i32 = arith.constant 0 : i32
    %c0_i32_0 = arith.constant 0 : i32
    %c0_i32_1 = arith.constant 0 : i32
    return %arg1, %c0_i32, %c0_i32_0 : i32, i32, i32
  }
  func.func @transform_12(%arg0: i32, %arg1: i32) -> (i32, i32, i32) {
    %c0_i32 = arith.constant 0 : i32
    %c0_i32_0 = arith.constant 0 : i32
    %c0_i32_1 = arith.constant 0 : i32
    return %arg1, %c0_i32, %c0_i32_0 : i32, i32, i32
  }
  func.func @transform_13(%arg0: i32, %arg1: i32) -> (i32, i32, i32) {
    %c0_i32 = arith.constant 0 : i32
    %c0_i32_0 = arith.constant 0 : i32
    %c0_i32_1 = arith.constant 0 : i32
    return %arg1, %c0_i32, %c0_i32_0 : i32, i32, i32
  }
  func.func @transform_14(%arg0: i32, %arg1: i32) -> (i32, i32, i32) {
    %c0_i32 = arith.constant 0 : i32
    %c0_i32_0 = arith.constant 0 : i32
    %c0_i32_1 = arith.constant 0 : i32
    return %arg1, %c0_i32, %c0_i32_0 : i32, i32, i32
  }
  func.func @transform_15(%arg0: i32, %arg1: i32) -> (i32, i32, i32) {
    %c0_i32 = arith.constant 0 : i32
    %c0_i32_0 = arith.constant 0 : i32
    %c0_i32_1 = arith.constant 0 : i32
    return %arg1, %c0_i32, %c0_i32_0 : i32, i32, i32
  }
  func.func @transform_16(%arg0: i32, %arg1: i32) -> (i32, i32) {
    %c0_i32 = arith.constant 0 : i32
    %c0_i32_0 = arith.constant 0 : i32
    %c0_i32_1 = arith.constant 0 : i32
    return %c0_i32, %c0_i32_0 : i32, i32
  }
  func.func @transform_17(%arg0: i32, %arg1: i32) -> (i32, i32) {
    %c0_i32 = arith.constant 0 : i32
    %c0_i32_0 = arith.constant 0 : i32
    %c0_i32_1 = arith.constant 0 : i32
    return %c0_i32, %c0_i32_0 : i32, i32
  }
  func.func @transform_18(%arg0: i32, %arg1: i32) -> (i32, i32, i32) {
    %c0_i32 = arith.constant 0 : i32
    %c0_i32_0 = arith.constant 0 : i32
    %c0_i32_1 = arith.constant 0 : i32
    return %arg0, %c0_i32, %c0_i32_0 : i32, i32, i32
  }
  func.func @transform_19(%arg0: i32, %arg1: i32) -> (i32, i32, i32, i32) {
    %c0_i32 = arith.constant 0 : i32
    %c0_i32_0 = arith.constant 0 : i32
    %c0_i32_1 = arith.constant 0 : i32
    return %arg1, %arg0, %c0_i32, %c0_i32_0 : i32, i32, i32, i32
  }
}

</mosaic_0001>

<llo_original>
// kernel: tpu_custom_call.1
$region0: #{tpu_custom_call.1}
  #allocation0 [shape = 'u32[]', space=smem, size = 0x4, offset = 0x4, fixed_abs, tag = 'smem constant byte address 0x4 - core index']
  #allocation1 [shape = 'u32[144,128]{1,0:T(1,128)}', space=vmem, size = 0x12000, scoped, tag = 'internal scratch']
  #allocation2 [shape = 'f32[1,8,32]{2,1,0:T(8,128)}', space=vmem, size = 0x1000, scoped, tag = 'scratch operand']
  %s0 = inlined_call_operand.hbm [shape: f32[2,8,32], index: 0, kind: input, shape index: {}]
  %s1 = inlined_call_operand.hbm [shape: f32[8,32], index: 1, kind: input, shape index: {}]
  %s2 = inlined_call_operand.hbm [shape: f32[2,1,8], index: 2, kind: input, shape index: {}]
  %s3 = inlined_call_operand.hbm [shape: f32[2,1,8], index: 3, kind: input, shape index: {}]
  %s4 = inlined_call_operand.vmem [shape: bf16[2,32,96], index: 4, kind: input, shape index: {}]
  %s5 = inlined_call_operand.hbm [shape: f32[2,1,96], index: 5, kind: input, shape index: {}]
  %s6 = inlined_call_operand.vmem [shape: bf16[2,32,32], index: 6, kind: input, shape index: {}]
  %s7 = inlined_call_operand.hbm [shape: f32[2,1,32], index: 7, kind: input, shape index: {}]
  %s8 = inlined_call_operand.vmem [shape: bf16[2,32,64], index: 8, kind: input, shape index: {}]
  %s9 = inlined_call_operand.hbm [shape: f32[2,1,64], index: 9, kind: input, shape index: {}]
  %s10 = inlined_call_operand.vmem [shape: bf16[2,64,32], index: 10, kind: input, shape index: {}]
  %s11 = inlined_call_operand.vmem [shape: f32[2,1,32], index: 11, kind: input, shape index: {}]
  %s12 = inlined_call_operand.vmem [shape: f32[2,1,32], index: 12, kind: input, shape index: {}]
  %s13 = inlined_call_operand.vmem [shape: f32[2,1,32], index: 13, kind: input, shape index: {}]
  %s14 = inlined_call_operand.vmem [shape: f32[2,1,32], index: 14, kind: input, shape index: {}]
  %s15 = inlined_call_operand.vmem [shape: f32[2,1,32], index: 15, kind: input, shape index: {}]
  %s16 = inlined_call_operand.vmem [shape: bf16[32,128], index: 16, kind: input, shape index: {}]
  %s17 = inlined_call_operand.vmem [shape: f32[1,128], index: 17, kind: input, shape index: {}]
  %s18 = inlined_call_operand.hbm [shape: f32[2,1,128], index: 18, kind: output, shape index: {0}]
  %s19 = inlined_call_operand.hbm [shape: f32[2,2,8,8], index: 19, kind: output, shape index: {1}]
  %20 = xla_tuple %s18, %s19
  %s21 = sld [smem:[#allocation0]]
  $region149: #{tpu_custom_call.1} parent=0
    _
  %s23 = ssub.s32 1, %s21
  %s24 = scalar_select 0, %s23, %s21
  $region1: #{tpu_custom_call.1} parent=0
    #allocation3 [shape = 'u8[8192]{0}', space=vmem, size = 0x2000, scoped, tag = 'input window, operand 0']
    #allocation4 [shape = 's32[2]{0}', space=sflag, size = 0x8, scoped, tag = 'scoped memory for tpu_custom_call.1']
    #allocation5 [shape = 's32[2]{0}', space=sflag, size = 0x8, scoped, tag = 'scoped memory for tpu_custom_call.1']
    #allocation6 [shape = 'u8[4096]{0}', space=vmem, size = 0x1000, scoped, tag = 'input window, operand 1, single buffered']
    #allocation7 [shape = 's32[1]{0}', space=sflag, size = 0x4, scoped, tag = 'scoped memory for tpu_custom_call.1']
    #allocation8 [shape = 'u8[1024]{0}', space=vmem, size = 0x400, scoped, tag = 'input window, operand 2']
    #allocation9 [shape = 'u8[1024]{0}', space=vmem, size = 0x400, scoped, tag = 'input window, operand 3']
    #allocation10 [shape = 'u8[1024]{0}', space=vmem, size = 0x400, scoped, tag = 'input window, operand 5']
    #allocation11 [shape = 'u8[1024]{0}', space=vmem, size = 0x400, scoped, tag = 'input window, operand 7']
    #allocation12 [shape = 'u8[1024]{0}', space=vmem, size = 0x400, scoped, tag = 'input window, operand 9']
    #allocation13 [shape = 'u8[1024]{0}', space=vmem, size = 0x400, scoped, tag = 'output window, operand 0']
    #allocation14 [shape = 'u8[8192]{0}', space=vmem, size = 0x2000, scoped, tag = 'output window, operand 1']
    #allocation15 [shape = 's32[2]{0}', space=sflag, size = 0x8, scoped, tag = 'scoped memory for tpu_custom_call.1']
    %25 = vsyncpa [#allocation4], 0
    %s26 = scalar_lea.sflag [#allocation4], 1
    %27 = vsyncpa %s26, 0
    %28 = vsyncpa [#allocation7], 0
    %29 = vsyncpa [#allocation5], 0
    %s30 = scalar_lea.sflag [#allocation5], 1
    %31 = vsyncpa %s30, 0
    %32 = vsyncpa [#allocation15], 0
    %s33 = scalar_lea.sflag [#allocation15], 1
    %34 = vsyncpa %s33, 0
    loop: start=0, step=1, limit=6
    $region2: #{tpu_custom_call.1} parent=1 // loop_pre_header
      _
    $region3: #{tpu_custom_call.1} parent=1 // loop_header
      %s36 = sphi 0, %s40
      %p37 = scmp.ge.s32.totalorder %s36, 6
      %s43 = sphi 0, %s55
      %s44 = sphi 0, %s51
      %s45 = sphi 0, %s43
      %s46 = sphi 0, %s44
      %s47 = sphi 0, %s45
      %s48 = sphi 0, %s46
      %s58 = sphi 0, %s60
      %s61 = sphi 0, %s58
      %s62 = sphi 0, %s61
      %s78 = sphi 0, %s62
      %s82 = sphi 0, %s82
      %s84 = sphi 0, %s82
      %s85 = sphi 0, %s84
      %s99 = sphi 0, %s85
      %s105 = sphi 0, %s107
      %s108 = sphi 0, %s105
      %s109 = sphi 0, %s108
      %s125 = sphi 0, %s109
      %s131 = sphi 0, %s133
      %s134 = sphi 0, %s131
      %s135 = sphi 0, %s134
      %s151 = sphi 0, %s135
      %s157 = sphi 0, %s159
      %s160 = sphi 0, %s157
      %s161 = sphi 0, %s160
      %s177 = sphi 0, %s161
      %s183 = sphi 0, %s185
      %s186 = sphi 0, %s183
      %s187 = sphi 0, %s186
      %s203 = sphi 0, %s187
      %s209 = sphi 0, %s211
      %s212 = sphi 0, %s209
      %s213 = sphi 0, %s212
      %s229 = sphi 0, %s213
      %s235 = sphi 0, %s237
      %s238 = sphi 0, %s235
      %s239 = sphi 0, %s238
      %s255 = sphi 0, %s239
      %s261 = sphi 0, %s263
      %s264 = sphi 0, %s261
      %s265 = sphi 0, %s264
      %s281 = sphi 0, %s265
      %s287 = sphi 0, %s289
      %s290 = sphi 0, %s287
      %s291 = sphi 0, %s290
      %s307 = sphi 0, %s291
      %s313 = sphi 0, %s315
      %s316 = sphi 0, %s313
      %s317 = sphi 0, %s316
      %s333 = sphi 0, %s317
      %s339 = sphi 0, %s341
      %s342 = sphi 0, %s339
      %s343 = sphi 0, %s342
      %s359 = sphi 0, %s343
      %s365 = sphi 0, %s367
      %s368 = sphi 0, %s365
      %s369 = sphi 0, %s368
      %s385 = sphi 0, %s369
      %s391 = sphi 0, %s393
      %s394 = sphi 0, %s391
      %s395 = sphi 0, %s394
      %s411 = sphi 0, %s395
      %s417 = sphi 0, %s419
      %s420 = sphi 0, %s417
      %s421 = sphi 0, %s420
      %s437 = sphi 0, %s421
      %s443 = sphi 0, %s445
      %s446 = sphi 0, %s443
      %s447 = sphi 0, %s446
      %s463 = sphi 0, %s447
      %s467 = sphi 0, %s467
      %s469 = sphi 0, %s467
      %s470 = sphi 0, %s469
      %s484 = sphi 0, %s470
      %s488 = sphi 0, %s488
      %s490 = sphi 0, %s488
      %s491 = sphi 0, %s490
      %s505 = sphi 0, %s491
      %s511 = sphi 0, %s513
      %s514 = sphi 0, %s511
      %s515 = sphi 0, %s514
      %s531 = sphi 0, %s515
      %s539 = sphi 0, %s541
      %s542 = sphi 0, %s539
      %s543 = sphi 0, %s542
      %s559 = sphi 0, %s543
    $region4: #{tpu_custom_call.1} parent=1 // loop_header_branch
      %39 = sbr.rel (%p37) target = $region8
    $region5: #{tpu_custom_call.1} parent=1 // loop_body
      %s41 = ssub.s32 %s36, 1
      %s42 = ssub.s32 %s36, 2
      %s49 = sadd.s32 1, %s44
      %p50 = scmp.ge.s32.totalorder %s49, 2
      %s51 = scalar_select %p50, 0, %s49
      %s52 = sadd.s32 1, %s43
      %s53 = scalar_select %p50, %s52, %s43
      %p54 = scmp.ge.s32.totalorder %s53, 2
      %s55 = scalar_select %p54, 0, %s53
      %s56 = ssub.s32 %s43, %s55
      %p57 = scmp.eq.s32.totalorder %s56, 0
      %s59 = sadd.s32 %s58, 1
      %s60 = scalar_select %p57, %s58, %s59
      %p63 = pneg %p57
      %p64 = scmp.eq.s32.totalorder %s36, 3
      %p65 = por %p63, %p64
      %p66 = scmp.ne.s32.totalorder %s58, %s61
      %p67 = scmp.eq.s32.totalorder %s36, 0
      %p68 = por %p66, %p67
      %p69 = scmp.ne.s32.totalorder %s58, %s61
      %p70 = scmp.eq.s32.totalorder %s41, 3
      %p71 = por %p69, %p70
      %p72 = scmp.ne.s32.totalorder %s61, %s62
      %p73 = scmp.eq.s32.totalorder %s41, 0
      %p74 = por %p72, %p73
      %p75 = scmp.ne.s32.totalorder %s61, %s62
      %p76 = scmp.eq.s32.totalorder %s42, 3
      %p77 = por %p75, %p76
      %p79 = scmp.ne.s32.totalorder %s62, %s78
      %p80 = scmp.eq.s32.totalorder %s42, 0
      %p81 = por %p79, %p80
      %s83 = sadd.s32 %s82, 1
      %p86 = scmp.eq.s32.totalorder %s36, 3
      %p87 = scmp.ne.s32.totalorder %s82, %s84
      %p88 = scmp.eq.s32.totalorder %s36, 0
      %p89 = por %p87, %p88
      %p90 = scmp.ne.s32.totalorder %s82, %s84
      %p91 = scmp.eq.s32.totalorder %s41, 3
      %p92 = por %p90, %p91
      %p93 = scmp.ne.s32.totalorder %s84, %s85
      %p94 = scmp.eq.s32.totalorder %s41, 0
      %p95 = por %p93, %p94
      %p96 = scmp.ne.s32.totalorder %s84, %s85
      %p97 = scmp.eq.s32.totalorder %s42, 3
      %p98 = por %p96, %p97
      %p100 = scmp.ne.s32.totalorder %s85, %s99
      %p101 = scmp.eq.s32.totalorder %s42, 0
      %p102 = por %p100, %p101
      %s103 = ssub.s32 %s43, %s55
      %p104 = scmp.eq.s32.totalorder %s103, 0
      %s106 = sadd.s32 %s105, 1
      %s107 = scalar_select %p104, %s105, %s106
      %p110 = pneg %p104
      %p111 = scmp.eq.s32.totalorder %s36, 3
      %p112 = por %p110, %p111
      %p113 = scmp.ne.s32.totalorder %s105, %s108
      %p114 = scmp.eq.s32.totalorder %s36, 0
      %p115 = por %p113, %p114
      %p116 = scmp.ne.s32.totalorder %s105, %s108
      %p117 = scmp.eq.s32.totalorder %s41, 3
      %p118 = por %p116, %p117
      %p119 = scmp.ne.s32.totalorder %s108, %s109
      %p120 = scmp.eq.s32.totalorder %s41, 0
      %p121 = por %p119, %p120
      %p122 = scmp.ne.s32.totalorder %s108, %s109
      %p123 = scmp.eq.s32.totalorder %s42, 3
      %p124 = por %p122, %p123
      %p126 = scmp.ne.s32.totalorder %s109, %s125
      %p127 = scmp.eq.s32.totalorder %s42, 0
      %p128 = por %p126, %p127
      %s129 = ssub.s32 %s43, %s55
      %p130 = scmp.eq.s32.totalorder %s129, 0
      %s132 = sadd.s32 %s131, 1
      %s133 = scalar_select %p130, %s131, %s132
      %p136 = pneg %p130
      %p137 = scmp.eq.s32.totalorder %s36, 3
      %p138 = por %p136, %p137
      %p139 = scmp.ne.s32.totalorder %s131, %s134
      %p140 = scmp.eq.s32.totalorder %s36, 0
      %p141 = por %p139, %p140
      %p142 = scmp.ne.s32.totalorder %s131, %s134
      %p143 = scmp.eq.s32.totalorder %s41, 3
      %p144 = por %p142, %p143
      %p145 = scmp.ne.s32.totalorder %s134, %s135
      %p146 = scmp.eq.s32.totalorder %s41, 0
      %p147 = por %p145, %p146
      %p148 = scmp.ne.s32.totalorder %s134, %s135
      %p149 = scmp.eq.s32.totalorder %s42, 3
      %p150 = por %p148, %p149
      %p152 = scmp.ne.s32.totalorder %s135, %s151
      %p153 = scmp.eq.s32.totalorder %s42, 0
      %p154 = por %p152, %p153
      %s155 = ssub.s32 %s44, %s51
      %p156 = scmp.eq.s32.totalorder %s155, 0
      %s158 = sadd.s32 %s157, 1
      %s159 = scalar_select %p156, %s157, %s158
      %p162 = pneg %p156
      %p163 = scmp.eq.s32.totalorder %s36, 3
      %p164 = por %p162, %p163
      %p165 = scmp.ne.s32.totalorder %s157, %s160
      %p166 = scmp.eq.s32.totalorder %s36, 0
      %p167 = por %p165, %p166
      %p168 = scmp.ne.s32.totalorder %s157, %s160
      %p169 = scmp.eq.s32.totalorder %s41, 3
      %p170 = por %p168, %p169
      %p171 = scmp.ne.s32.totalorder %s160, %s161
      %p172 = scmp.eq.s32.totalorder %s41, 0
      %p173 = por %p171, %p172
      %p174 = scmp.ne.s32.totalorder %s160, %s161
      %p175 = scmp.eq.s32.totalorder %s42, 3
      %p176 = por %p174, %p175
      %p178 = scmp.ne.s32.totalorder %s161, %s177
      %p179 = scmp.eq.s32.totalorder %s42, 0
      %p180 = por %p178, %p179
      %s181 = ssub.s32 %s44, %s51
      %p182 = scmp.eq.s32.totalorder %s181, 0
      %s184 = sadd.s32 %s183, 1
      %s185 = scalar_select %p182, %s183, %s184
      %p188 = pneg %p182
      %p189 = scmp.eq.s32.totalorder %s36, 3
      %p190 = por %p188, %p189
      %p191 = scmp.ne.s32.totalorder %s183, %s186
      %p192 = scmp.eq.s32.totalorder %s36, 0
      %p193 = por %p191, %p192
      %p194 = scmp.ne.s32.totalorder %s183, %s186
      %p195 = scmp.eq.s32.totalorder %s41, 3
      %p196 = por %p194, %p195
      %p197 = scmp.ne.s32.totalorder %s186, %s187
      %p198 = scmp.eq.s32.totalorder %s41, 0
      %p199 = por %p197, %p198
      %p200 = scmp.ne.s32.totalorder %s186, %s187
      %p201 = scmp.eq.s32.totalorder %s42, 3
      %p202 = por %p200, %p201
      %p204 = scmp.ne.s32.totalorder %s187, %s203
      %p205 = scmp.eq.s32.totalorder %s42, 0
      %p206 = por %p204, %p205
      %s207 = ssub.s32 %s44, %s51
      %p208 = scmp.eq.s32.totalorder %s207, 0
      %s210 = sadd.s32 %s209, 1
      %s211 = scalar_select %p208, %s209, %s210
      %p214 = pneg %p208
      %p215 = scmp.eq.s32.totalorder %s36, 3
      %p216 = por %p214, %p215
      %p217 = scmp.ne.s32.totalorder %s209, %s212
      %p218 = scmp.eq.s32.totalorder %s36, 0
      %p219 = por %p217, %p218
      %p220 = scmp.ne.s32.totalorder %s209, %s212
      %p221 = scmp.eq.s32.totalorder %s41, 3
      %p222 = por %p220, %p221
      %p223 = scmp.ne.s32.totalorder %s212, %s213
      %p224 = scmp.eq.s32.totalorder %s41, 0
      %p225 = por %p223, %p224
      %p226 = scmp.ne.s32.totalorder %s212, %s213
      %p227 = scmp.eq.s32.totalorder %s42, 3
      %p228 = por %p226, %p227
      %p230 = scmp.ne.s32.totalorder %s213, %s229
      %p231 = scmp.eq.s32.totalorder %s42, 0
      %p232 = por %p230, %p231
      %s233 = ssub.s32 %s44, %s51
      %p234 = scmp.eq.s32.totalorder %s233, 0
      %s236 = sadd.s32 %s235, 1
      %s237 = scalar_select %p234, %s235, %s236
      %p240 = pneg %p234
      %p241 = scmp.eq.s32.totalorder %s36, 3
      %p242 = por %p240, %p241
      %p243 = scmp.ne.s32.totalorder %s235, %s238
      %p244 = scmp.eq.s32.totalorder %s36, 0
      %p245 = por %p243, %p244
      %p246 = scmp.ne.s32.totalorder %s235, %s238
      %p247 = scmp.eq.s32.totalorder %s41, 3
      %p248 = por %p246, %p247
      %p249 = scmp.ne.s32.totalorder %s238, %s239
      %p250 = scmp.eq.s32.totalorder %s41, 0
      %p251 = por %p249, %p250
      %p252 = scmp.ne.s32.totalorder %s238, %s239
      %p253 = scmp.eq.s32.totalorder %s42, 3
      %p254 = por %p252, %p253
      %p256 = scmp.ne.s32.totalorder %s239, %s255
      %p257 = scmp.eq.s32.totalorder %s42, 0
      %p258 = por %p256, %p257
      %s259 = ssub.s32 %s44, %s51
      %p260 = scmp.eq.s32.totalorder %s259, 0
      %s262 = sadd.s32 %s261, 1
      %s263 = scalar_select %p260, %s261, %s262
      %p266 = pneg %p260
      %p267 = scmp.eq.s32.totalorder %s36, 3
      %p268 = por %p266, %p267
      %p269 = scmp.ne.s32.totalorder %s261, %s264
      %p270 = scmp.eq.s32.totalorder %s36, 0
      %p271 = por %p269, %p270
      %p272 = scmp.ne.s32.totalorder %s261, %s264
      %p273 = scmp.eq.s32.totalorder %s41, 3
      %p274 = por %p272, %p273
      %p275 = scmp.ne.s32.totalorder %s264, %s265
      %p276 = scmp.eq.s32.totalorder %s41, 0
      %p277 = por %p275, %p276
      %p278 = scmp.ne.s32.totalorder %s264, %s265
      %p279 = scmp.eq.s32.totalorder %s42, 3
      %p280 = por %p278, %p279
      %p282 = scmp.ne.s32.totalorder %s265, %s281
      %p283 = scmp.eq.s32.totalorder %s42, 0
      %p284 = por %p282, %p283
      %s285 = ssub.s32 %s44, %s51
      %p286 = scmp.eq.s32.totalorder %s285, 0
      %s288 = sadd.s32 %s287, 1
      %s289 = scalar_select %p286, %s287, %s288
      %p292 = pneg %p286
      %p293 = scmp.eq.s32.totalorder %s36, 3
      %p294 = por %p292, %p293
      %p295 = scmp.ne.s32.totalorder %s287, %s290
      %p296 = scmp.eq.s32.totalorder %s36, 0
      %p297 = por %p295, %p296
      %p298 = scmp.ne.s32.totalorder %s287, %s290
      %p299 = scmp.eq.s32.totalorder %s41, 3
      %p300 = por %p298, %p299
      %p301 = scmp.ne.s32.totalorder %s290, %s291
      %p302 = scmp.eq.s32.totalorder %s41, 0
      %p303 = por %p301, %p302
      %p304 = scmp.ne.s32.totalorder %s290, %s291
      %p305 = scmp.eq.s32.totalorder %s42, 3
      %p306 = por %p304, %p305
      %p308 = scmp.ne.s32.totalorder %s291, %s307
      %p309 = scmp.eq.s32.totalorder %s42, 0
      %p310 = por %p308, %p309
      %s311 = ssub.s32 %s44, %s51
      %p312 = scmp.eq.s32.totalorder %s311, 0
      %s314 = sadd.s32 %s313, 1
      %s315 = scalar_select %p312, %s313, %s314
      %p318 = pneg %p312
      %p319 = scmp.eq.s32.totalorder %s36, 3
      %p320 = por %p318, %p319
      %p321 = scmp.ne.s32.totalorder %s313, %s316
      %p322 = scmp.eq.s32.totalorder %s36, 0
      %p323 = por %p321, %p322
      %p324 = scmp.ne.s32.totalorder %s313, %s316
      %p325 = scmp.eq.s32.totalorder %s41, 3
      %p326 = por %p324, %p325
      %p327 = scmp.ne.s32.totalorder %s316, %s317
      %p328 = scmp.eq.s32.totalorder %s41, 0
      %p329 = por %p327, %p328
      %p330 = scmp.ne.s32.totalorder %s316, %s317
      %p331 = scmp.eq.s32.totalorder %s42, 3
      %p332 = por %p330, %p331
      %p334 = scmp.ne.s32.totalorder %s317, %s333
      %p335 = scmp.eq.s32.totalorder %s42, 0
      %p336 = por %p334, %p335
      %s337 = ssub.s32 %s44, %s51
      %p338 = scmp.eq.s32.totalorder %s337, 0
      %s340 = sadd.s32 %s339, 1
      %s341 = scalar_select %p338, %s339, %s340
      %p344 = pneg %p338
      %p345 = scmp.eq.s32.totalorder %s36, 3
      %p346 = por %p344, %p345
      %p347 = scmp.ne.s32.totalorder %s339, %s342
      %p348 = scmp.eq.s32.totalorder %s36, 0
      %p349 = por %p347, %p348
      %p350 = scmp.ne.s32.totalorder %s339, %s342
      %p351 = scmp.eq.s32.totalorder %s41, 3
      %p352 = por %p350, %p351
      %p353 = scmp.ne.s32.totalorder %s342, %s343
      %p354 = scmp.eq.s32.totalorder %s41, 0
      %p355 = por %p353, %p354
      %p356 = scmp.ne.s32.totalorder %s342, %s343
      %p357 = scmp.eq.s32.totalorder %s42, 3
      %p358 = por %p356, %p357
      %p360 = scmp.ne.s32.totalorder %s343, %s359
      %p361 = scmp.eq.s32.totalorder %s42, 0
      %p362 = por %p360, %p361
      %s363 = ssub.s32 %s44, %s51
      %p364 = scmp.eq.s32.totalorder %s363, 0
      %s366 = sadd.s32 %s365, 1
      %s367 = scalar_select %p364, %s365, %s366
      %p370 = pneg %p364
      %p371 = scmp.eq.s32.totalorder %s36, 3
      %p372 = por %p370, %p371
      %p373 = scmp.ne.s32.totalorder %s365, %s368
      %p374 = scmp.eq.s32.totalorder %s36, 0
      %p375 = por %p373, %p374
      %p376 = scmp.ne.s32.totalorder %s365, %s368
      %p377 = scmp.eq.s32.totalorder %s41, 3
      %p378 = por %p376, %p377
      %p379 = scmp.ne.s32.totalorder %s368, %s369
      %p380 = scmp.eq.s32.totalorder %s41, 0
      %p381 = por %p379, %p380
      %p382 = scmp.ne.s32.totalorder %s368, %s369
      %p383 = scmp.eq.s32.totalorder %s42, 3
      %p384 = por %p382, %p383
      %p386 = scmp.ne.s32.totalorder %s369, %s385
      %p387 = scmp.eq.s32.totalorder %s42, 0
      %p388 = por %p386, %p387
      %s389 = ssub.s32 %s44, %s51
      %p390 = scmp.eq.s32.totalorder %s389, 0
      %s392 = sadd.s32 %s391, 1
      %s393 = scalar_select %p390, %s391, %s392
      %p396 = pneg %p390
      %p397 = scmp.eq.s32.totalorder %s36, 3
      %p398 = por %p396, %p397
      %p399 = scmp.ne.s32.totalorder %s391, %s394
      %p400 = scmp.eq.s32.totalorder %s36, 0
      %p401 = por %p399, %p400
      %p402 = scmp.ne.s32.totalorder %s391, %s394
      %p403 = scmp.eq.s32.totalorder %s41, 3
      %p404 = por %p402, %p403
      %p405 = scmp.ne.s32.totalorder %s394, %s395
      %p406 = scmp.eq.s32.totalorder %s41, 0
      %p407 = por %p405, %p406
      %p408 = scmp.ne.s32.totalorder %s394, %s395
      %p409 = scmp.eq.s32.totalorder %s42, 3
      %p410 = por %p408, %p409
      %p412 = scmp.ne.s32.totalorder %s395, %s411
      %p413 = scmp.eq.s32.totalorder %s42, 0
      %p414 = por %p412, %p413
      %s415 = ssub.s32 %s44, %s51
      %p416 = scmp.eq.s32.totalorder %s415, 0
      %s418 = sadd.s32 %s417, 1
      %s419 = scalar_select %p416, %s417, %s418
      %p422 = pneg %p416
      %p423 = scmp.eq.s32.totalorder %s36, 3
      %p424 = por %p422, %p423
      %p425 = scmp.ne.s32.totalorder %s417, %s420
      %p426 = scmp.eq.s32.totalorder %s36, 0
      %p427 = por %p425, %p426
      %p428 = scmp.ne.s32.totalorder %s417, %s420
      %p429 = scmp.eq.s32.totalorder %s41, 3
      %p430 = por %p428, %p429
      %p431 = scmp.ne.s32.totalorder %s420, %s421
      %p432 = scmp.eq.s32.totalorder %s41, 0
      %p433 = por %p431, %p432
      %p434 = scmp.ne.s32.totalorder %s420, %s421
      %p435 = scmp.eq.s32.totalorder %s42, 3
      %p436 = por %p434, %p435
      %p438 = scmp.ne.s32.totalorder %s421, %s437
      %p439 = scmp.eq.s32.totalorder %s42, 0
      %p440 = por %p438, %p439
      %s441 = ssub.s32 %s44, %s51
      %p442 = scmp.eq.s32.totalorder %s441, 0
      %s444 = sadd.s32 %s443, 1
      %s445 = scalar_select %p442, %s443, %s444
      %p448 = pneg %p442
      %p449 = scmp.eq.s32.totalorder %s36, 3
      %p450 = por %p448, %p449
      %p451 = scmp.ne.s32.totalorder %s443, %s446
      %p452 = scmp.eq.s32.totalorder %s36, 0
      %p453 = por %p451, %p452
      %p454 = scmp.ne.s32.totalorder %s443, %s446
      %p455 = scmp.eq.s32.totalorder %s41, 3
      %p456 = por %p454, %p455
      %p457 = scmp.ne.s32.totalorder %s446, %s447
      %p458 = scmp.eq.s32.totalorder %s41, 0
      %p459 = por %p457, %p458
      %p460 = scmp.ne.s32.totalorder %s446, %s447
      %p461 = scmp.eq.s32.totalorder %s42, 3
      %p462 = por %p460, %p461
      %p464 = scmp.ne.s32.totalorder %s447, %s463
      %p465 = scmp.eq.s32.totalorder %s42, 0
      %p466 = por %p464, %p465
      %s468 = sadd.s32 %s467, 1
      %p471 = scmp.eq.s32.totalorder %s36, 3
      %p472 = scmp.ne.s32.totalorder %s467, %s469
      %p473 = scmp.eq.s32.totalorder %s36, 0
      %p474 = por %p472, %p473
      %p475 = scmp.ne.s32.totalorder %s467, %s469
      %p476 = scmp.eq.s32.totalorder %s41, 3
      %p477 = por %p475, %p476
      %p478 = scmp.ne.s32.totalorder %s469, %s470
      %p479 = scmp.eq.s32.totalorder %s41, 0
      %p480 = por %p478, %p479
      %p481 = scmp.ne.s32.totalorder %s469, %s470
      %p482 = scmp.eq.s32.totalorder %s42, 3
      %p483 = por %p481, %p482
      %p485 = scmp.ne.s32.totalorder %s470, %s484
      %p486 = scmp.eq.s32.totalorder %s42, 0
      %p487 = por %p485, %p486
      %s489 = sadd.s32 %s488, 1
      %p492 = scmp.eq.s32.totalorder %s36, 3
      %p493 = scmp.ne.s32.totalorder %s488, %s490
      %p494 = scmp.eq.s32.totalorder %s36, 0
      %p495 = por %p493, %p494
      %p496 = scmp.ne.s32.totalorder %s488, %s490
      %p497 = scmp.eq.s32.totalorder %s41, 3
      %p498 = por %p496, %p497
      %p499 = scmp.ne.s32.totalorder %s490, %s491
      %p500 = scmp.eq.s32.totalorder %s41, 0
      %p501 = por %p499, %p500
      %p502 = scmp.ne.s32.totalorder %s490, %s491
      %p503 = scmp.eq.s32.totalorder %s42, 3
      %p504 = por %p502, %p503
      %p506 = scmp.ne.s32.totalorder %s491, %s505
      %p507 = scmp.eq.s32.totalorder %s42, 0
      %p508 = por %p506, %p507
      %s509 = ssub.s32 %s43, %s55
      %p510 = scmp.eq.s32.totalorder %s509, 0
      %s512 = sadd.s32 %s511, 1
      %s513 = scalar_select %p510, %s511, %s512
      %p516 = pneg %p510
      %p517 = scmp.eq.s32.totalorder %s36, 3
      %p518 = por %p516, %p517
      %p519 = scmp.ne.s32.totalorder %s511, %s514
      %p520 = scmp.eq.s32.totalorder %s36, 0
      %p521 = por %p519, %p520
      %p522 = scmp.ne.s32.totalorder %s511, %s514
      %p523 = scmp.eq.s32.totalorder %s41, 3
      %p524 = por %p522, %p523
      %p525 = scmp.ne.s32.totalorder %s514, %s515
      %p526 = scmp.eq.s32.totalorder %s41, 0
      %p527 = por %p525, %p526
      %p528 = scmp.ne.s32.totalorder %s514, %s515
      %p529 = scmp.eq.s32.totalorder %s42, 3
      %p530 = por %p528, %p529
      %p532 = scmp.ne.s32.totalorder %s515, %s531
      %p533 = scmp.eq.s32.totalorder %s42, 0
      %p534 = por %p532, %p533
      %s535 = ssub.s32 %s44, %s51
      %s536 = ssub.s32 %s43, %s55
      %s537 = sor.u32 %s535, %s536
      %p538 = scmp.eq.s32.totalorder %s537, 0
      %s540 = sadd.s32 %s539, 1
      %s541 = scalar_select %p538, %s539, %s540
      %p544 = pneg %p538
      %p545 = scmp.eq.s32.totalorder %s36, 3
      %p546 = por %p544, %p545
      %p547 = scmp.ne.s32.totalorder %s539, %s542
      %p548 = scmp.eq.s32.totalorder %s36, 0
      %p549 = por %p547, %p548
      %p550 = scmp.ne.s32.totalorder %s539, %s542
      %p551 = scmp.eq.s32.totalorder %s41, 3
      %p552 = por %p550, %p551
      %p553 = scmp.ne.s32.totalorder %s542, %s543
      %p554 = scmp.eq.s32.totalorder %s41, 0
      %p555 = por %p553, %p554
      %p556 = scmp.ne.s32.totalorder %s542, %s543
      %p557 = scmp.eq.s32.totalorder %s42, 3
      %p558 = por %p556, %p557
      %p560 = scmp.ne.s32.totalorder %s543, %s559
      %p561 = scmp.eq.s32.totalorder %s42, 0
      %p562 = por %p560, %p561
      %p563 = scmp.le.s32.totalorder 1, %s36
      %p564 = scmp.lt.s32.totalorder %s36, 5
      %p565 = pnand %p563, %p564
      %p566 = pneg %p565
      // Predicated region
      $region9: #{tpu_custom_call.1} parent=5 // pred_check
        _
      $region10: #{tpu_custom_call.1} parent=5 // pred_check_branch
        %568 = sbr.rel (%p565) target = $region12
      $region11: #{tpu_custom_call.1} parent=5 // pred_region
        %s569 = ssub.s32 %s36, 1
        // Predicated region
        $region13: #{tpu_custom_call.1} parent=11 // pred_check
          %p570 = pneg %p95
        $region14: #{tpu_custom_call.1} parent=11 // pred_check_branch
          %572 = sbr.rel (%p570) target = $region16
        $region15: #{tpu_custom_call.1} parent=11 // pred_region
          %s574 = ssub.s32 128, 128
          %575 = vsyncadd [#allocation7], %s574
          %s577 = sshll.u32 [#allocation6], 4
          %s578 = int_to_ptr.vmem [resolvable:$true] %s577
          %580 = dma.hbm_to_vmem [thread:$0]  %s1, 128, %s578, [#allocation7]
        $region16: #{tpu_custom_call.1} parent=11 // pred_fallthru
          _
        // Predicated region
        $region17: #{tpu_custom_call.1} parent=11 // pred_check
          %p581 = pneg %p480
        $region18: #{tpu_custom_call.1} parent=11 // pred_check_branch
          %583 = sbr.rel (%p581) target = $region20
        $region19: #{tpu_custom_call.1} parent=11 // pred_region
          _
        $region20: #{tpu_custom_call.1} parent=11 // pred_fallthru
          _
        // Predicated region
        $region21: #{tpu_custom_call.1} parent=11 // pred_check
          %p584 = pneg %p501
        $region22: #{tpu_custom_call.1} parent=11 // pred_check_branch
          %586 = sbr.rel (%p584) target = $region24
        $region23: #{tpu_custom_call.1} parent=11 // pred_region
          _
        $region24: #{tpu_custom_call.1} parent=11 // pred_fallthru
          _
      $region12: #{tpu_custom_call.1} parent=5 // pred_fallthru
        _
      %p587 = scmp.lt.s32.totalorder %s36, 4
      // Predicated region
      $region25: #{tpu_custom_call.1} parent=5 // pred_check
        %p588 = pneg %p587
      $region26: #{tpu_custom_call.1} parent=5 // pred_check_branch
        %590 = sbr.rel (%p588) target = $region28
      $region27: #{tpu_custom_call.1} parent=5 // pred_region
        // Predicated region
        $region29: #{tpu_custom_call.1} parent=27 // pred_check
          %p591 = pneg %p68
        $region30: #{tpu_custom_call.1} parent=27 // pred_check_branch
          %593 = sbr.rel (%p591) target = $region32
        $region31: #{tpu_custom_call.1} parent=27 // pred_region
          %s594 = sand.u32 %s36, 1
          %s595 = scalar_lea.sflag [#allocation4], %s594
          %s596 = sand.u32 %s58, 1
          %s597 = smul.addr %s596, 8
          %s598 = scalar_lea.vmem [#allocation3], %s597
          %s600 = ssub.s32 128, 128
          %601 = vsyncadd %s595, %s600
          %s602 = smul.addr %s43, 128
          %s603 = scalar_lea.hbm %s0, %s602
          %s605 = sshll.u32 %s598, 4
          %s606 = int_to_ptr.vmem [resolvable:$true] %s605
          %608 = dma.hbm_to_vmem [thread:$0]  %s603, 128, %s606, %s595
        $region32: #{tpu_custom_call.1} parent=27 // pred_fallthru
          _
        // Predicated region
        $region33: #{tpu_custom_call.1} parent=27 // pred_check
          %p609 = pneg %p115
        $region34: #{tpu_custom_call.1} parent=27 // pred_check_branch
          %611 = sbr.rel (%p609) target = $region36
        $region35: #{tpu_custom_call.1} parent=27 // pred_region
          %s612 = sand.u32 %s36, 1
          %s613 = scalar_lea.sflag [#allocation4], %s612
          %s614 = sand.u32 %s105, 1
          %s615 = scalar_lea.vmem [#allocation8], %s614
          %s617 = ssub.s32 16, 16
          %618 = vsyncadd %s613, %s617
          %s619 = smul.addr %s43, 16
          %s620 = scalar_lea.hbm %s2, %s619
          %s622 = sshll.u32 %s615, 4
          %s623 = int_to_ptr.vmem [resolvable:$true] %s622
          %625 = dma.hbm_to_vmem [thread:$0]  %s620, 16, %s623, %s613
        $region36: #{tpu_custom_call.1} parent=27 // pred_fallthru
          _
        // Predicated region
        $region37: #{tpu_custom_call.1} parent=27 // pred_check
          %p626 = pneg %p141
        $region38: #{tpu_custom_call.1} parent=27 // pred_check_branch
          %628 = sbr.rel (%p626) target = $region40
        $region39: #{tpu_custom_call.1} parent=27 // pred_region
          %s629 = sand.u32 %s36, 1
          %s630 = scalar_lea.sflag [#allocation4], %s629
          %s631 = sand.u32 %s131, 1
          %s632 = scalar_lea.vmem [#allocation9], %s631
          %s634 = ssub.s32 16, 16
          %635 = vsyncadd %s630, %s634
          %s636 = smul.addr %s43, 16
          %s637 = scalar_lea.hbm %s3, %s636
          %s639 = sshll.u32 %s632, 4
          %s640 = int_to_ptr.vmem [resolvable:$true] %s639
          %642 = dma.hbm_to_vmem [thread:$0]  %s637, 16, %s640, %s630
        $region40: #{tpu_custom_call.1} parent=27 // pred_fallthru
          _
        // Predicated region
        $region41: #{tpu_custom_call.1} parent=27 // pred_check
          %p643 = pneg %p167
        $region42: #{tpu_custom_call.1} parent=27 // pred_check_branch
          %645 = sbr.rel (%p643) target = $region44
        $region43: #{tpu_custom_call.1} parent=27 // pred_region
          %p646 = scmp.lt.s32.totalorder %s44, 1
          %s647 = scalar_select %p646, %s44, 1
          %s648 = smul.addr %s647, 4
          %s649 = smul.addr %s648, 4
          %s650 = scalar_lea.vmem %s4, %s649
        $region44: #{tpu_custom_call.1} parent=27 // pred_fallthru
          _
        // Predicated region
        $region45: #{tpu_custom_call.1} parent=27 // pred_check
          %p651 = pneg %p193
        $region46: #{tpu_custom_call.1} parent=27 // pred_check_branch
          %653 = sbr.rel (%p651) target = $region48
        $region47: #{tpu_custom_call.1} parent=27 // pred_region
          %s654 = sand.u32 %s36, 1
          %s655 = scalar_lea.sflag [#allocation4], %s654
          %s656 = sand.u32 %s183, 1
          %s657 = scalar_lea.vmem [#allocation10], %s656
          %s659 = ssub.s32 16, 16
          %660 = vsyncadd %s655, %s659
          %s661 = smul.addr %s44, 16
          %s662 = scalar_lea.hbm %s5, %s661
          %s664 = sshll.u32 %s657, 4
          %s665 = int_to_ptr.vmem [resolvable:$true] %s664
          %667 = dma.hbm_to_vmem [thread:$0]  %s662, 16, %s665, %s655
        $region48: #{tpu_custom_call.1} parent=27 // pred_fallthru
          _
        // Predicated region
        $region49: #{tpu_custom_call.1} parent=27 // pred_check
          %p668 = pneg %p219
        $region50: #{tpu_custom_call.1} parent=27 // pred_check_branch
          %670 = sbr.rel (%p668) target = $region52
        $region51: #{tpu_custom_call.1} parent=27 // pred_region
          %p671 = scmp.lt.s32.totalorder %s44, 1
          %s672 = scalar_select %p671, %s44, 1
          %s673 = smul.addr %s672, 4
          %s674 = smul.addr %s673, 4
          %s675 = scalar_lea.vmem %s6, %s674
        $region52: #{tpu_custom_call.1} parent=27 // pred_fallthru
          _
        // Predicated region
        $region53: #{tpu_custom_call.1} parent=27 // pred_check
          %p676 = pneg %p245
        $region54: #{tpu_custom_call.1} parent=27 // pred_check_branch
          %678 = sbr.rel (%p676) target = $region56
        $region55: #{tpu_custom_call.1} parent=27 // pred_region
          %s679 = sand.u32 %s36, 1
          %s680 = scalar_lea.sflag [#allocation4], %s679
          %s681 = sand.u32 %s235, 1
          %s682 = scalar_lea.vmem [#allocation11], %s681
          %s684 = ssub.s32 16, 16
          %685 = vsyncadd %s680, %s684
          %s686 = smul.addr %s44, 16
          %s687 = scalar_lea.hbm %s7, %s686
          %s689 = sshll.u32 %s682, 4
          %s690 = int_to_ptr.vmem [resolvable:$true] %s689
          %692 = dma.hbm_to_vmem [thread:$0]  %s687, 16, %s690, %s680
        $region56: #{tpu_custom_call.1} parent=27 // pred_fallthru
          _
        // Predicated region
        $region57: #{tpu_custom_call.1} parent=27 // pred_check
          %p693 = pneg %p271
        $region58: #{tpu_custom_call.1} parent=27 // pred_check_branch
          %695 = sbr.rel (%p693) target = $region60
        $region59: #{tpu_custom_call.1} parent=27 // pred_region
          %p696 = scmp.lt.s32.totalorder %s44, 1
          %s697 = scalar_select %p696, %s44, 1
          %s698 = smul.addr %s697, 4
          %s699 = smul.addr %s698, 4
          %s700 = scalar_lea.vmem %s8, %s699
        $region60: #{tpu_custom_call.1} parent=27 // pred_fallthru
          _
        // Predicated region
        $region61: #{tpu_custom_call.1} parent=27 // pred_check
          %p701 = pneg %p297
        $region62: #{tpu_custom_call.1} parent=27 // pred_check_branch
          %703 = sbr.rel (%p701) target = $region64
        $region63: #{tpu_custom_call.1} parent=27 // pred_region
          %s704 = sand.u32 %s36, 1
          %s705 = scalar_lea.sflag [#allocation4], %s704
          %s706 = sand.u32 %s287, 1
          %s707 = scalar_lea.vmem [#allocation12], %s706
          %s709 = ssub.s32 16, 16
          %710 = vsyncadd %s705, %s709
          %s711 = smul.addr %s44, 16
          %s712 = scalar_lea.hbm %s9, %s711
          %s714 = sshll.u32 %s707, 4
          %s715 = int_to_ptr.vmem [resolvable:$true] %s714
          %717 = dma.hbm_to_vmem [thread:$0]  %s712, 16, %s715, %s705
        $region64: #{tpu_custom_call.1} parent=27 // pred_fallthru
          _
        // Predicated region
        $region65: #{tpu_custom_call.1} parent=27 // pred_check
          %p718 = pneg %p323
        $region66: #{tpu_custom_call.1} parent=27 // pred_check_branch
          %720 = sbr.rel (%p718) target = $region68
        $region67: #{tpu_custom_call.1} parent=27 // pred_region
          %p721 = scmp.lt.s32.totalorder %s44, 1
          %s722 = scalar_select %p721, %s44, 1
          %s723 = smul.addr %s722, 8
          %s724 = smul.addr %s723, 4
          %s725 = scalar_lea.vmem %s10, %s724
        $region68: #{tpu_custom_call.1} parent=27 // pred_fallthru
          _
        // Predicated region
        $region69: #{tpu_custom_call.1} parent=27 // pred_check
          %p726 = pneg %p349
        $region70: #{tpu_custom_call.1} parent=27 // pred_check_branch
          %728 = sbr.rel (%p726) target = $region72
        $region71: #{tpu_custom_call.1} parent=27 // pred_region
          %p729 = scmp.lt.s32.totalorder %s44, 1
          %s730 = scalar_select %p729, %s44, 1
          %s731 = scalar_lea.vmem %s11, %s730
        $region72: #{tpu_custom_call.1} parent=27 // pred_fallthru
          _
        // Predicated region
        $region73: #{tpu_custom_call.1} parent=27 // pred_check
          %p732 = pneg %p375
        $region74: #{tpu_custom_call.1} parent=27 // pred_check_branch
          %734 = sbr.rel (%p732) target = $region76
        $region75: #{tpu_custom_call.1} parent=27 // pred_region
          %p735 = scmp.lt.s32.totalorder %s44, 1
          %s736 = scalar_select %p735, %s44, 1
          %s737 = scalar_lea.vmem %s12, %s736
        $region76: #{tpu_custom_call.1} parent=27 // pred_fallthru
          _
        // Predicated region
        $region77: #{tpu_custom_call.1} parent=27 // pred_check
          %p738 = pneg %p401
        $region78: #{tpu_custom_call.1} parent=27 // pred_check_branch
          %740 = sbr.rel (%p738) target = $region80
        $region79: #{tpu_custom_call.1} parent=27 // pred_region
          %p741 = scmp.lt.s32.totalorder %s44, 1
          %s742 = scalar_select %p741, %s44, 1
          %s743 = scalar_lea.vmem %s13, %s742
        $region80: #{tpu_custom_call.1} parent=27 // pred_fallthru
          _
        // Predicated region
        $region81: #{tpu_custom_call.1} parent=27 // pred_check
          %p744 = pneg %p427
        $region82: #{tpu_custom_call.1} parent=27 // pred_check_branch
          %746 = sbr.rel (%p744) target = $region84
        $region83: #{tpu_custom_call.1} parent=27 // pred_region
          %p747 = scmp.lt.s32.totalorder %s44, 1
          %s748 = scalar_select %p747, %s44, 1
          %s749 = scalar_lea.vmem %s14, %s748
        $region84: #{tpu_custom_call.1} parent=27 // pred_fallthru
          _
        // Predicated region
        $region85: #{tpu_custom_call.1} parent=27 // pred_check
          %p750 = pneg %p453
        $region86: #{tpu_custom_call.1} parent=27 // pred_check_branch
          %752 = sbr.rel (%p750) target = $region88
        $region87: #{tpu_custom_call.1} parent=27 // pred_region
          %p753 = scmp.lt.s32.totalorder %s44, 1
          %s754 = scalar_select %p753, %s44, 1
          %s755 = scalar_lea.vmem %s15, %s754
        $region88: #{tpu_custom_call.1} parent=27 // pred_fallthru
          _
      $region28: #{tpu_custom_call.1} parent=5 // pred_fallthru
        _
      %p756 = scmp.le.s32.totalorder 1, %s36
      %p757 = scmp.lt.s32.totalorder %s36, 5
      %p758 = pnand %p756, %p757
      %p759 = pneg %p758
      // Predicated region
      $region89: #{tpu_custom_call.1} parent=5 // pred_check
        _
      $region90: #{tpu_custom_call.1} parent=5 // pred_check_branch
        %761 = sbr.rel (%p758) target = $region92
      $region91: #{tpu_custom_call.1} parent=5 // pred_region
        %s762 = ssub.s32 %s36, 1
        %s763 = sand.u32 %s41, 1
        %s764 = scalar_lea.sflag [#allocation4], %s763
        %s765 = sand.u32 %s61, 1
        %s766 = smul.addr %s765, 8
        %s767 = scalar_lea.vmem [#allocation3], %s766
        // Predicated region
        $region93: #{tpu_custom_call.1} parent=91 // pred_check
          %p768 = pneg %p74
        $region94: #{tpu_custom_call.1} parent=91 // pred_check_branch
          %770 = sbr.rel (%p768) target = $region96
        $region95: #{tpu_custom_call.1} parent=91 // pred_region
          %771 = dma.done %s764, 128
        $region96: #{tpu_custom_call.1} parent=91 // pred_fallthru
          _
        // Predicated region
        $region97: #{tpu_custom_call.1} parent=91 // pred_check
          %p772 = pneg %p95
        $region98: #{tpu_custom_call.1} parent=91 // pred_check_branch
          %774 = sbr.rel (%p772) target = $region100
        $region99: #{tpu_custom_call.1} parent=91 // pred_region
          %775 = dma.done [#allocation7], 128
        $region100: #{tpu_custom_call.1} parent=91 // pred_fallthru
          _
        %s776 = sand.u32 %s41, 1
        %s777 = scalar_lea.sflag [#allocation4], %s776
        %s778 = sand.u32 %s108, 1
        %s779 = scalar_lea.vmem [#allocation8], %s778
        // Predicated region
        $region101: #{tpu_custom_call.1} parent=91 // pred_check
          %p780 = pneg %p121
        $region102: #{tpu_custom_call.1} parent=91 // pred_check_branch
          %782 = sbr.rel (%p780) target = $region104
        $region103: #{tpu_custom_call.1} parent=91 // pred_region
          %783 = dma.done %s777, 16
        $region104: #{tpu_custom_call.1} parent=91 // pred_fallthru
          _
        %s784 = sand.u32 %s41, 1
        %s785 = scalar_lea.sflag [#allocation4], %s784
        %s786 = sand.u32 %s134, 1
        %s787 = scalar_lea.vmem [#allocation9], %s786
        // Predicated region
        $region105: #{tpu_custom_call.1} parent=91 // pred_check
          %p788 = pneg %p147
        $region106: #{tpu_custom_call.1} parent=91 // pred_check_branch
          %790 = sbr.rel (%p788) target = $region108
        $region107: #{tpu_custom_call.1} parent=91 // pred_region
          %791 = dma.done %s785, 16
        $region108: #{tpu_custom_call.1} parent=91 // pred_fallthru
          _
        %s792 = sand.u32 %s41, 1
        %s793 = scalar_lea.sflag [#allocation4], %s792
        %s794 = sand.u32 %s186, 1
        %s795 = scalar_lea.vmem [#allocation10], %s794
        // Predicated region
        $region109: #{tpu_custom_call.1} parent=91 // pred_check
          %p796 = pneg %p199
        $region110: #{tpu_custom_call.1} parent=91 // pred_check_branch
          %798 = sbr.rel (%p796) target = $region112
        $region111: #{tpu_custom_call.1} parent=91 // pred_region
          %799 = dma.done %s793, 16
        $region112: #{tpu_custom_call.1} parent=91 // pred_fallthru
          _
        %s800 = sand.u32 %s41, 1
        %s801 = scalar_lea.sflag [#allocation4], %s800
        %s802 = sand.u32 %s238, 1
        %s803 = scalar_lea.vmem [#allocation11], %s802
        // Predicated region
        $region113: #{tpu_custom_call.1} parent=91 // pred_check
          %p804 = pneg %p251
        $region114: #{tpu_custom_call.1} parent=91 // pred_check_branch
          %806 = sbr.rel (%p804) target = $region116
        $region115: #{tpu_custom_call.1} parent=91 // pred_region
          %807 = dma.done %s801, 16
        $region116: #{tpu_custom_call.1} parent=91 // pred_fallthru
          _
        %s808 = sand.u32 %s41, 1
        %s809 = scalar_lea.sflag [#allocation4], %s808
        %s810 = sand.u32 %s290, 1
        %s811 = scalar_lea.vmem [#allocation12], %s810
        // Predicated region
        $region117: #{tpu_custom_call.1} parent=91 // pred_check
          %p812 = pneg %p303
        $region118: #{tpu_custom_call.1} parent=91 // pred_check_branch
          %814 = sbr.rel (%p812) target = $region120
        $region119: #{tpu_custom_call.1} parent=91 // pred_region
          %815 = dma.done %s809, 16
        $region120: #{tpu_custom_call.1} parent=91 // pred_fallthru
          _
        %s816 = sand.u32 %s41, 1
        %s817 = scalar_lea.sflag [#allocation4], %s816
        %s818 = sand.u32 %s61, 1
        %s819 = smul.addr %s818, 8
        %s820 = scalar_lea.vmem [#allocation3], %s819
        %p821 = pneg %p74
        %p822 = pneg %p71
        %p823 = pneg %p95
        %p824 = pneg %p92
        %s825 = sand.u32 %s41, 1
        %s826 = scalar_lea.sflag [#allocation4], %s825
        %s827 = sand.u32 %s108, 1
        %s828 = scalar_lea.vmem [#allocation8], %s827
        %p829 = pneg %p121
        %p830 = pneg %p118
        %s831 = sand.u32 %s41, 1
        %s832 = scalar_lea.sflag [#allocation4], %s831
        %s833 = sand.u32 %s134, 1
        %s834 = scalar_lea.vmem [#allocation9], %s833
        %p835 = pneg %p147
        %p836 = pneg %p144
        %p837 = scmp.lt.s32.totalorder %s46, 1
        %s838 = scalar_select %p837, %s46, 1
        %s839 = smul.addr %s838, 4
        %s840 = smul.addr %s839, 4
        %s841 = scalar_lea.vmem %s4, %s840
        %p842 = pneg %p173
        %p843 = pneg %p170
        %s844 = sand.u32 %s41, 1
        %s845 = scalar_lea.sflag [#allocation4], %s844
        %s846 = sand.u32 %s186, 1
        %s847 = scalar_lea.vmem [#allocation10], %s846
        %p848 = pneg %p199
        %p849 = pneg %p196
        %p850 = scmp.lt.s32.totalorder %s46, 1
        %s851 = scalar_select %p850, %s46, 1
        %s852 = smul.addr %s851, 4
        %s853 = smul.addr %s852, 4
        %s854 = scalar_lea.vmem %s6, %s853
        %p855 = pneg %p225
        %p856 = pneg %p222
        %s857 = sand.u32 %s41, 1
        %s858 = scalar_lea.sflag [#allocation4], %s857
        %s859 = sand.u32 %s238, 1
        %s860 = scalar_lea.vmem [#allocation11], %s859
        %p861 = pneg %p251
        %p862 = pneg %p248
        %p863 = scmp.lt.s32.totalorder %s46, 1
        %s864 = scalar_select %p863, %s46, 1
        %s865 = smul.addr %s864, 4
        %s866 = smul.addr %s865, 4
        %s867 = scalar_lea.vmem %s8, %s866
        %p868 = pneg %p277
        %p869 = pneg %p274
        %s870 = sand.u32 %s41, 1
        %s871 = scalar_lea.sflag [#allocation4], %s870
        %s872 = sand.u32 %s290, 1
        %s873 = scalar_lea.vmem [#allocation12], %s872
        %p874 = pneg %p303
        %p875 = pneg %p300
        %p876 = scmp.lt.s32.totalorder %s46, 1
        %s877 = scalar_select %p876, %s46, 1
        %s878 = smul.addr %s877, 8
        %s879 = smul.addr %s878, 4
        %s880 = scalar_lea.vmem %s10, %s879
        %p881 = pneg %p329
        %p882 = pneg %p326
        %p883 = scmp.lt.s32.totalorder %s46, 1
        %s884 = scalar_select %p883, %s46, 1
        %s885 = scalar_lea.vmem %s11, %s884
        %p886 = pneg %p355
        %p887 = pneg %p352
        %p888 = scmp.lt.s32.totalorder %s46, 1
        %s889 = scalar_select %p888, %s46, 1
        %s890 = scalar_lea.vmem %s12, %s889
        %p891 = pneg %p381
        %p892 = pneg %p378
        %p893 = scmp.lt.s32.totalorder %s46, 1
        %s894 = scalar_select %p893, %s46, 1
        %s895 = scalar_lea.vmem %s13, %s894
        %p896 = pneg %p407
        %p897 = pneg %p404
        %p898 = scmp.lt.s32.totalorder %s46, 1
        %s899 = scalar_select %p898, %s46, 1
        %s900 = scalar_lea.vmem %s14, %s899
        %p901 = pneg %p433
        %p902 = pneg %p430
        %p903 = scmp.lt.s32.totalorder %s46, 1
        %s904 = scalar_select %p903, %s46, 1
        %s905 = scalar_lea.vmem %s15, %s904
        %p906 = pneg %p459
        %p907 = pneg %p456
        %p908 = pneg %p480
        %p909 = pneg %p477
        %p910 = pneg %p501
        %p911 = pneg %p498
        %p912 = pneg %p527
        %p913 = pneg %p524
        %s914 = sand.u32 %s514, 1
        %s915 = scalar_lea.sflag [#allocation5], %s914
        %s916 = sand.u32 %s514, 1
        %s917 = scalar_lea.vmem [#allocation13], %s916
        %p918 = pneg %p555
        %p919 = pneg %p552
        %s920 = sand.u32 %s542, 1
        %s921 = scalar_lea.sflag [#allocation15], %s920
        %s922 = sand.u32 %s542, 1
        %s923 = smul.addr %s922, 8
        %s924 = scalar_lea.vmem [#allocation14], %s923
        %p925 = scmp.lt.s32.totalorder %s46, 1
        %s926 = scalar_select %p925, %s46, 1
        %s927 = smul.addr %s926, 4
        %s928 = smul.addr %s927, 4
        %s929 = scalar_lea.vmem %s4, %s928
        %p930 = scmp.lt.s32.totalorder %s46, 1
        %s931 = scalar_select %p930, %s46, 1
        %s932 = smul.addr %s931, 4
        %s933 = smul.addr %s932, 4
        %s934 = scalar_lea.vmem %s6, %s933
        %p935 = scmp.lt.s32.totalorder %s46, 1
        %s936 = scalar_select %p935, %s46, 1
        %s937 = smul.addr %s936, 4
        %s938 = smul.addr %s937, 4
        %s939 = scalar_lea.vmem %s8, %s938
        %p940 = scmp.lt.s32.totalorder %s46, 1
        %s941 = scalar_select %p940, %s46, 1
        %s942 = smul.addr %s941, 8
        %s943 = smul.addr %s942, 4
        %s944 = scalar_lea.vmem %s10, %s943
        %p945 = scmp.lt.s32.totalorder %s46, 1
        %s946 = scalar_select %p945, %s46, 1
        %s947 = scalar_lea.vmem %s11, %s946
        %p948 = scmp.lt.s32.totalorder %s46, 1
        %s949 = scalar_select %p948, %s46, 1
        %s950 = scalar_lea.vmem %s12, %s949
        %p951 = scmp.lt.s32.totalorder %s46, 1
        %s952 = scalar_select %p951, %s46, 1
        %s953 = scalar_lea.vmem %s13, %s952
        %p954 = scmp.lt.s32.totalorder %s46, 1
        %s955 = scalar_select %p954, %s46, 1
        %s956 = scalar_lea.vmem %s14, %s955
        %p957 = scmp.lt.s32.totalorder %s46, 1
        %s958 = scalar_select %p957, %s46, 1
        %s959 = scalar_lea.vmem %s15, %s958
        %p961 = scmp.eq.s32.totalorder %s46, 0
        // Predicated region
        $region121: #{tpu_custom_call.1} parent=91 // pred_check
          %p962 = pneg %p961
        $region122: #{tpu_custom_call.1} parent=91 // pred_check_branch
          %964 = sbr.rel (%p962) target = $region124
        $region123: #{tpu_custom_call.1} parent=91 // pred_region
          %v965 = vld [vmem:[%s767] sm:$0xff]
          %v966 = vmul.f32 %v965, 5.656854
          %v967 = vld [vmem:[#allocation6] sm:$0xff]
          %v968 = vadd.f32 %v966, %v967
          %vm969 = vcmask 261120
          %970 = vst.msk [vmem:[#allocation2] sm:$0xff] %vm969, %v968
        $region124: #{tpu_custom_call.1} parent=91 // pred_fallthru
          _
        %v971 = vld [vmem:[#allocation2] sm:$0xff]
        %v972 = vld [vmem:[%s929] sm:$0xf]
        %v973 = vld [vmem:[%s929 + $0x4] sm:$0xf]
        %v974 = vld [vmem:[%s929 + $0x8] sm:$0xf]
        %v975 = vld [vmem:[%s929 + $0xc] sm:$0xf]
        %v976 = vpack.c.bf16 %v971, %v971
        %v977 = vld [vmem:[%s795] sm:$0x1]
        %v979 = vlaneseq
        %v980 = vshrl.u32 %v979, 7
        %v981 = vsub.s32 0, %v980
        %v982 = vrot.slane %v977, %v981
        %v988 = vunpack.c.l.b16 %v972
        %v989 = vunpack.c.l.b16 %v973
        %v990 = vunpack.c.l.b16 %v974
        %v991 = vunpack.c.l.b16 %v975
        %v992 = vpack.c.b16 %v989, %v988
        %v993 = vpack.c.b16 %v991, %v990
        %vm996 = vcmask 261120
        %v998 = vsel %vm996, %v976, 0
        %1000 = vmatprep.subr.bf16.mxu0 0
        %1001 = vmatpush1.bf16.msra.mxu0 0
        %1002 = vmatprep.subr.bf16.mxu0 0
        %1003 = vmatpush1.bf16.msra.mxu0 0
        %1004 = vmatprep.subr.bf16.mxu0 0
        %1005 = vmatpush1.bf16.msra.mxu0 0
        %1006 = vmatprep.subr.bf16.mxu0 0
        %1007 = vmatpush1.bf16.msra.mxu0 0
        %1008 = vmatprep.subr.bf16.mxu0 0
        %1009 = vmatpush1.bf16.msra.mxu0 0
        %1010 = vmatprep.subr.bf16.mxu0 0
        %1011 = vmatpush1.bf16.msra.mxu0 0
        %1012 = vmatprep.subr.bf16.mxu0 0
        %1013 = vmatpush1.bf16.msra.mxu0 %v993
        %1014 = vmatprep.subr.bf16.mxu0 0
        %1015 = vmatpush1.bf16.msra.mxu0 %v992
        %1016 = vmatprep.subr.bf16.mxu0 0
        %1017 = vmatpush2.bf16.msra.mxu0 0
        %1018 = vmatprep.subr.bf16.mxu0 0
        %1019 = vmatpush2.bf16.msra.mxu0 0
        %1020 = vmatprep.subr.bf16.mxu0 0
        %1021 = vmatpush2.bf16.msra.mxu0 0
        %1022 = vmatprep.subr.bf16.mxu0 0
        %1023 = vmatpush2.bf16.msra.mxu0 0
        %1024 = vmatprep.subr.bf16.mxu0 0
        %1025 = vmatpush2.bf16.msra.mxu0 0
        %1026 = vmatprep.subr.bf16.mxu0 0
        %1027 = vmatpush2.bf16.msra.mxu0 0
        %1028 = vmatprep.subr.bf16.mxu0 0
        %1029 = vmatpush2.bf16.msra.mxu0 0
        %1030 = vmatprep.subr.bf16.mxu0 0
        %1031 = vmatpush2.bf16.msra.mxu0 0
        %1032 = vmatprep.mubr.bf16.mxu0 0
        %1033 = vmatmul.mubr.bf16.gmra.mxu0 %v998
        %v1034 = vpop.f32.mrf.mxu0
        %v1035 = vadd.f32 %v982, %v1034
        %v1036 = vpop.f32.mrf.mxu0
        %v1037 = vpop.f32.mrf.mxu0
        %v1038 = vpop.f32.mrf.mxu0
        %1039 = vdwg.mxu0
        %1041 = vrot.lane.b32.xlu0 %v1035, 112
        %v1042 = vpop.permute.xlu0 %1041
        %v1044 = vpack.c.bf16 %v1035, %v1035
        %v1045 = vpack.c.bf16 %v1042, %v1042
        %1047 = vrot.lane.b32.xlu0 %v1044, 96
        %v1048 = vpop.permute.xlu0 %1047
        %vm1049 = vcmask 130048
        %v1051 = vsel %vm1049, %v1044, 0
        %v1054 = vsel %vm1049, %v1048, 0
        %1056 = vmatprep.subr.bf16.mxu0 0
        %1057 = vmatpush1.bf16.xpose.msra.mxu0 0
        %1058 = vmatprep.subr.bf16.mxu0 0
        %1059 = vmatpush1.bf16.xpose.msra.mxu0 0
        %1060 = vmatprep.subr.bf16.mxu0 0
        %1061 = vmatpush1.bf16.xpose.msra.mxu0 0
        %1062 = vmatprep.subr.bf16.mxu0 0
        %1063 = vmatpush1.bf16.xpose.msra.mxu0 0
        %1064 = vmatprep.subr.bf16.mxu0 0
        %1065 = vmatpush1.bf16.xpose.msra.mxu0 0
        %1066 = vmatprep.subr.bf16.mxu0 0
        %1067 = vmatpush1.bf16.xpose.msra.mxu0 0
        %1068 = vmatprep.subr.bf16.mxu0 0
        %1069 = vmatpush1.bf16.xpose.msra.mxu0 0
        %1070 = vmatprep.subr.bf16.mxu0 0
        %1071 = vmatpush1.bf16.xpose.msra.mxu0 %v1054
        %1072 = vmatprep.subr.bf16.mxu0 0
        %1073 = vmatpush2.bf16.xpose.msra.mxu0 0
        %1074 = vmatprep.subr.bf16.mxu0 0
        %1075 = vmatpush2.bf16.xpose.msra.mxu0 0
        %1076 = vmatprep.subr.bf16.mxu0 0
        %1077 = vmatpush2.bf16.xpose.msra.mxu0 0
        %1078 = vmatprep.subr.bf16.mxu0 0
        %1079 = vmatpush2.bf16.xpose.msra.mxu0 0
        %1080 = vmatprep.subr.bf16.mxu0 0
        %1081 = vmatpush2.bf16.xpose.msra.mxu0 0
        %1082 = vmatprep.subr.bf16.mxu0 0
        %1083 = vmatpush2.bf16.xpose.msra.mxu0 0
        %1084 = vmatprep.subr.bf16.mxu0 0
        %1085 = vmatpush2.bf16.xpose.msra.mxu0 0
        %1086 = vmatprep.subr.bf16.mxu0 0
        %1087 = vmatpush2.bf16.xpose.msra.mxu0 0
        %1088 = vmatprep.mubr.bf16.mxu0 0
        %1089 = vmatmul.mubr.bf16.gmra.mxu0 %v1051
        %v1090 = vpop.f32.mrf.mxu0
        %v1091 = vadd.f32 0.0, %v1090
        %v1092 = vpop.f32.mrf.mxu0
        %v1093 = vpop.f32.mrf.mxu0
        %v1094 = vpop.f32.mrf.mxu0
        %1095 = vdwg.mxu0
        %1097 = vrot.lane.b32.xlu0 %v1045, 96
        %v1098 = vpop.permute.xlu0 %1097
        %v1100 = vsel %vm1049, %v1045, 0
        %v1103 = vsel %vm1049, %v1098, 0
        %1105 = vmatprep.subr.bf16.mxu0 0
        %1106 = vmatpush1.bf16.xpose.msra.mxu0 0
        %1107 = vmatprep.subr.bf16.mxu0 0
        %1108 = vmatpush1.bf16.xpose.msra.mxu0 0
        %1109 = vmatprep.subr.bf16.mxu0 0
        %1110 = vmatpush1.bf16.xpose.msra.mxu0 0
        %1111 = vmatprep.subr.bf16.mxu0 0
        %1112 = vmatpush1.bf16.xpose.msra.mxu0 0
        %1113 = vmatprep.subr.bf16.mxu0 0
        %1114 = vmatpush1.bf16.xpose.msra.mxu0 0
        %1115 = vmatprep.subr.bf16.mxu0 0
        %1116 = vmatpush1.bf16.xpose.msra.mxu0 0
        %1117 = vmatprep.subr.bf16.mxu0 0
        %1118 = vmatpush1.bf16.xpose.msra.mxu0 0
        %1119 = vmatprep.subr.bf16.mxu0 0
        %1120 = vmatpush1.bf16.xpose.msra.mxu0 %v1103
        %1121 = vmatprep.subr.bf16.mxu0 0
        %1122 = vmatpush2.bf16.xpose.msra.mxu0 0
        %1123 = vmatprep.subr.bf16.mxu0 0
        %1124 = vmatpush2.bf16.xpose.msra.mxu0 0
        %1125 = vmatprep.subr.bf16.mxu0 0
        %1126 = vmatpush2.bf16.xpose.msra.mxu0 0
        %1127 = vmatprep.subr.bf16.mxu0 0
        %1128 = vmatpush2.bf16.xpose.msra.mxu0 0
        %1129 = vmatprep.subr.bf16.mxu0 0
        %1130 = vmatpush2.bf16.xpose.msra.mxu0 0
        %1131 = vmatprep.subr.bf16.mxu0 0
        %1132 = vmatpush2.bf16.xpose.msra.mxu0 0
        %1133 = vmatprep.subr.bf16.mxu0 0
        %1134 = vmatpush2.bf16.xpose.msra.mxu0 0
        %1135 = vmatprep.subr.bf16.mxu0 0
        %1136 = vmatpush2.bf16.xpose.msra.mxu0 0
        %1137 = vmatprep.mubr.bf16.mxu0 0
        %1138 = vmatmul.mubr.bf16.gmra.mxu0 %v1100
        %v1139 = vpop.f32.mrf.mxu0
        %v1140 = vadd.f32 0.0, %v1139
        %v1141 = vpop.f32.mrf.mxu0
        %v1142 = vpop.f32.mrf.mxu0
        %v1143 = vpop.f32.mrf.mxu0
        %1144 = vdwg.mxu0
        %v1145 = vld [vmem:[%s779] sm:$0x1]
        %v1146 = vmul.f32 %v1091, 0.25
        %v1147 = vmul.f32 %v1140, 0.25
        %v1149 = vlaneseq
        %v1150 = vshrl.u32 %v1149, 7
        %v1151 = vsub.s32 0, %v1150
        %v1152 = vrot.slane %v1145, %v1151
        %v1154 = vadd.f32 %v1146, %v1152
        %v1155 = vadd.f32 %v1147, %v1152
        %vm1156 = vcmask 64512
        %v1157 = vsel %vm1156, %v1154, -inf
        %1158 = vmax.xlane.f32.xlu0 %v1157
        %v1159 = vpop.xlane.xlu0 %1158
        %v1160 = vsel %vm1156, %v1155, -inf
        %1161 = vmax.xlane.f32.xlu0 %v1160
        %v1162 = vpop.xlane.xlu0 %1161
        %v1163 = vsub.f32 %v1154, %v1159
        %v1164 = vsub.f32 %v1155, %v1162
        %v1165 = vmul.f32 %v1163, 1.442695
        %v1166 = vpow.pop %v1165
        %v1167 = vmul.f32 %v1164, 1.442695
        %v1168 = vpow.pop %v1167
        %v1169 = vsel %vm1156, %v1166, 0.0
        %1170 = vadd.xlane.f32.xlu0 %v1169
        %v1171 = vpop.xlane.xlu0 %1170
        %v1172 = vsel %vm1156, %v1168, 0.0
        %1173 = vadd.xlane.f32.xlu0 %v1172
        %v1174 = vpop.xlane.xlu0 %1173
        %v1175 = vrcp.pop %v1171
        %v1176 = vmul.f32 %v1166, %v1175
        %v1177 = vrcp.pop %v1174
        %v1178 = vmul.f32 %v1168, %v1177
        %v1179 = vsel %vm1156, %v1176, 0.0
        %v1180 = vsel %vm1156, %v1178, 0.0
        %v1181 = vadd.f32 %v1179, %v1180
        %v1182 = vrcp.pop 2.0
        %v1183 = vmul.f32 %v1181, %v1182
        %1184 = vst.msk [vmem:[%s924] sm:$0xff] %vm1156, %v1183
        %v1185 = vpack.c.bf16 %v1176, %v1176
        %v1186 = vpack.c.bf16 %v1178, %v1178
        %1187 = vrot.lane.b32.xlu0 %v1044, 64
        %v1188 = vpop.permute.xlu0 %1187
        %v1190 = vsel %vm1156, %v1185, 0
        %vm1192 = vcmask 1043456
        %v1194 = vsel %vm1192, %v1188, 0
        %1196 = vmatprep.subr.bf16.mxu0 0
        %1197 = vmatpush1.bf16.msra.mxu0 0
        %1198 = vmatprep.subr.bf16.mxu0 0
        %1199 = vmatpush1.bf16.msra.mxu0 0
        %1200 = vmatprep.subr.bf16.mxu0 0
        %1201 = vmatpush1.bf16.msra.mxu0 0
        %1202 = vmatprep.subr.bf16.mxu0 0
        %1203 = vmatpush1.bf16.msra.mxu0 0
        %1204 = vmatprep.subr.bf16.mxu0 0
        %1205 = vmatpush1.bf16.msra.mxu0 0
        %1206 = vmatprep.subr.bf16.mxu0 0
        %1207 = vmatpush1.bf16.msra.mxu0 0
        %1208 = vmatprep.subr.bf16.mxu0 0
        %1209 = vmatpush1.bf16.msra.mxu0 0
        %1210 = vmatprep.subr.bf16.mxu0 0
        %1211 = vmatpush1.bf16.msra.mxu0 %v1194
        %1212 = vmatprep.subr.bf16.mxu0 0
        %1213 = vmatpush2.bf16.msra.mxu0 0
        %1214 = vmatprep.subr.bf16.mxu0 0
        %1215 = vmatpush2.bf16.msra.mxu0 0
        %1216 = vmatprep.subr.bf16.mxu0 0
        %1217 = vmatpush2.bf16.msra.mxu0 0
        %1218 = vmatprep.subr.bf16.mxu0 0
        %1219 = vmatpush2.bf16.msra.mxu0 0
        %1220 = vmatprep.subr.bf16.mxu0 0
        %1221 = vmatpush2.bf16.msra.mxu0 0
        %1222 = vmatprep.subr.bf16.mxu0 0
        %1223 = vmatpush2.bf16.msra.mxu0 0
        %1224 = vmatprep.subr.bf16.mxu0 0
        %1225 = vmatpush2.bf16.msra.mxu0 0
        %1226 = vmatprep.subr.bf16.mxu0 0
        %1227 = vmatpush2.bf16.msra.mxu0 0
        %1228 = vmatprep.mubr.bf16.mxu0 0
        %1229 = vmatmul.mubr.bf16.gmra.mxu0 %v1190
        %v1230 = vpop.f32.mrf.mxu0
        %v1231 = vadd.f32 0.0, %v1230
        %v1232 = vpop.f32.mrf.mxu0
        %v1233 = vpop.f32.mrf.mxu0
        %v1234 = vpop.f32.mrf.mxu0
        %1235 = vdwg.mxu0
        %1236 = vrot.lane.b32.xlu0 %v1045, 64
        %v1237 = vpop.permute.xlu0 %1236
        %v1239 = vsel %vm1156, %v1186, 0
        %v1242 = vsel %vm1192, %v1237, 0
        %1244 = vmatprep.subr.bf16.mxu0 0
        %1245 = vmatpush1.bf16.msra.mxu0 0
        %1246 = vmatprep.subr.bf16.mxu0 0
        %1247 = vmatpush1.bf16.msra.mxu0 0
        %1248 = vmatprep.subr.bf16.mxu0 0
        %1249 = vmatpush1.bf16.msra.mxu0 0
        %1250 = vmatprep.subr.bf16.mxu0 0
        %1251 = vmatpush1.bf16.msra.mxu0 0
        %1252 = vmatprep.subr.bf16.mxu0 0
        %1253 = vmatpush1.bf16.msra.mxu0 0
        %1254 = vmatprep.subr.bf16.mxu0 0
        %1255 = vmatpush1.bf16.msra.mxu0 0
        %1256 = vmatprep.subr.bf16.mxu0 0
        %1257 = vmatpush1.bf16.msra.mxu0 0
        %1258 = vmatprep.subr.bf16.mxu0 0
        %1259 = vmatpush1.bf16.msra.mxu0 %v1242
        %1260 = vmatprep.subr.bf16.mxu0 0
        %1261 = vmatpush2.bf16.msra.mxu0 0
        %1262 = vmatprep.subr.bf16.mxu0 0
        %1263 = vmatpush2.bf16.msra.mxu0 0
        %1264 = vmatprep.subr.bf16.mxu0 0
        %1265 = vmatpush2.bf16.msra.mxu0 0
        %1266 = vmatprep.subr.bf16.mxu0 0
        %1267 = vmatpush2.bf16.msra.mxu0 0
        %1268 = vmatprep.subr.bf16.mxu0 0
        %1269 = vmatpush2.bf16.msra.mxu0 0
        %1270 = vmatprep.subr.bf16.mxu0 0
        %1271 = vmatpush2.bf16.msra.mxu0 0
        %1272 = vmatprep.subr.bf16.mxu0 0
        %1273 = vmatpush2.bf16.msra.mxu0 0
        %1274 = vmatprep.subr.bf16.mxu0 0
        %1275 = vmatpush2.bf16.msra.mxu0 0
        %1276 = vmatprep.mubr.bf16.mxu0 0
        %1277 = vmatmul.mubr.bf16.gmra.mxu0 %v1239
        %v1278 = vpop.f32.mrf.mxu0
        %v1279 = vadd.f32 0.0, %v1278
        %v1280 = vpop.f32.mrf.mxu0
        %v1281 = vpop.f32.mrf.mxu0
        %v1282 = vpop.f32.mrf.mxu0
        %1283 = vdwg.mxu0
        %1285 = vrot.lane.b32.xlu0 %v1279, 16
        %v1286 = vpop.permute.xlu0 %1285
        %v1288 = vsel %vm1049, %v1231, %v1286
        %v1289 = vld [vmem:[%s934] sm:$0xf]
        %v1290 = vld [vmem:[%s934 + $0x4] sm:$0xf]
        %v1291 = vld [vmem:[%s934 + $0x8] sm:$0xf]
        %v1292 = vld [vmem:[%s934 + $0xc] sm:$0xf]
        %v1293 = vpack.c.bf16 %v1288, %v1288
        %v1294 = vld [vmem:[%s803] sm:$0x1]
        %v1296 = vlaneseq
        %v1297 = vshrl.u32 %v1296, 7
        %v1298 = vsub.s32 0, %v1297
        %v1299 = vrot.slane %v1294, %v1298
        %v1305 = vunpack.c.l.b16 %v1289
        %v1306 = vunpack.c.l.b16 %v1290
        %v1307 = vunpack.c.l.b16 %v1291
        %v1308 = vunpack.c.l.b16 %v1292
        %v1309 = vpack.c.b16 %v1306, %v1305
        %v1310 = vpack.c.b16 %v1308, %v1307
        %v1314 = vsel %vm996, %v1293, 0
        %1316 = vmatprep.subr.bf16.mxu0 0
        %1317 = vmatpush1.bf16.msra.mxu0 0
        %1318 = vmatprep.subr.bf16.mxu0 0
        %1319 = vmatpush1.bf16.msra.mxu0 0
        %1320 = vmatprep.subr.bf16.mxu0 0
        %1321 = vmatpush1.bf16.msra.mxu0 0
        %1322 = vmatprep.subr.bf16.mxu0 0
        %1323 = vmatpush1.bf16.msra.mxu0 0
        %1324 = vmatprep.subr.bf16.mxu0 0
        %1325 = vmatpush1.bf16.msra.mxu0 0
        %1326 = vmatprep.subr.bf16.mxu0 0
        %1327 = vmatpush1.bf16.msra.mxu0 0
        %1328 = vmatprep.subr.bf16.mxu0 0
        %1329 = vmatpush1.bf16.msra.mxu0 %v1310
        %1330 = vmatprep.subr.bf16.mxu0 0
        %1331 = vmatpush1.bf16.msra.mxu0 %v1309
        %1332 = vmatprep.subr.bf16.mxu0 0
        %1333 = vmatpush2.bf16.msra.mxu0 0
        %1334 = vmatprep.subr.bf16.mxu0 0
        %1335 = vmatpush2.bf16.msra.mxu0 0
        %1336 = vmatprep.subr.bf16.mxu0 0
        %1337 = vmatpush2.bf16.msra.mxu0 0
        %1338 = vmatprep.subr.bf16.mxu0 0
        %1339 = vmatpush2.bf16.msra.mxu0 0
        %1340 = vmatprep.subr.bf16.mxu0 0
        %1341 = vmatpush2.bf16.msra.mxu0 0
        %1342 = vmatprep.subr.bf16.mxu0 0
        %1343 = vmatpush2.bf16.msra.mxu0 0
        %1344 = vmatprep.subr.bf16.mxu0 0
        %1345 = vmatpush2.bf16.msra.mxu0 0
        %1346 = vmatprep.subr.bf16.mxu0 0
        %1347 = vmatpush2.bf16.msra.mxu0 0
        %1348 = vmatprep.mubr.bf16.mxu0 0
        %1349 = vmatmul.mubr.bf16.gmra.mxu0 %v1314
        %v1350 = vpop.f32.mrf.mxu0
        %v1351 = vadd.f32 %v1299, %v1350
        %v1352 = vpop.f32.mrf.mxu0
        %v1353 = vpop.f32.mrf.mxu0
        %v1354 = vpop.f32.mrf.mxu0
        %1355 = vdwg.mxu0
        %v1356 = vadd.f32 %v971, %v1351
        %v1357 = vsel %vm996, %v1356, 0.0
        %1358 = vadd.xlane.f32.xlu0 %v1357
        %v1359 = vpop.xlane.xlu0 %1358
        %v1360 = vrcp.pop 32.0
        %v1361 = vmul.f32 %v1359, %v1360
        %v1362 = vsub.f32 %v1356, %v1361
        %v1363 = vmul.f32 %v1362, %v1362
        %v1364 = vsel %vm996, %v1363, 0.0
        %1365 = vadd.xlane.f32.xlu0 %v1364
        %v1366 = vpop.xlane.xlu0 %1365
        %v1367 = vmul.f32 %v1366, %v1360
        %v1368 = vadd.f32 %v1367, 1e-05
        %v1369 = vrsqrt.pop %v1368
        %v1370 = vmul.f32 %v1362, %v1369
        %v1371 = vld [vmem:[%s950] sm:$0x1]
        %v1373 = vlaneseq
        %v1374 = vshrl.u32 %v1373, 7
        %v1375 = vsub.s32 0, %v1374
        %v1376 = vrot.slane %v1371, %v1375
        %v1378 = vmul.f32 %v1370, %v1376
        %v1379 = vld [vmem:[%s953] sm:$0x1]
        %v1381 = vlaneseq
        %v1382 = vshrl.u32 %v1381, 7
        %v1383 = vsub.s32 0, %v1382
        %v1384 = vrot.slane %v1379, %v1383
        %v1386 = vadd.f32 %v1378, %v1384
        %v1387 = vld [vmem:[%s939] sm:$0xf]
        %v1388 = vld [vmem:[%s939 + $0x4] sm:$0xf]
        %v1389 = vld [vmem:[%s939 + $0x8] sm:$0xf]
        %v1390 = vld [vmem:[%s939 + $0xc] sm:$0xf]
        %v1391 = vpack.c.bf16 %v1386, %v1386
        %v1392 = vld [vmem:[%s811] sm:$0x1]
        %v1394 = vlaneseq
        %v1395 = vshrl.u32 %v1394, 7
        %v1396 = vsub.s32 0, %v1395
        %v1397 = vrot.slane %v1392, %v1396
        %v1403 = vunpack.c.l.b16 %v1387
        %v1404 = vunpack.c.l.b16 %v1388
        %v1405 = vunpack.c.l.b16 %v1389
        %v1406 = vunpack.c.l.b16 %v1390
        %v1407 = vpack.c.b16 %v1404, %v1403
        %v1408 = vpack.c.b16 %v1406, %v1405
        %v1412 = vsel %vm996, %v1391, 0
        %1414 = vmatprep.subr.bf16.mxu0 0
        %1415 = vmatpush1.bf16.msra.mxu0 0
        %1416 = vmatprep.subr.bf16.mxu0 0
        %1417 = vmatpush1.bf16.msra.mxu0 0
        %1418 = vmatprep.subr.bf16.mxu0 0
        %1419 = vmatpush1.bf16.msra.mxu0 0
        %1420 = vmatprep.subr.bf16.mxu0 0
        %1421 = vmatpush1.bf16.msra.mxu0 0
        %1422 = vmatprep.subr.bf16.mxu0 0
        %1423 = vmatpush1.bf16.msra.mxu0 0
        %1424 = vmatprep.subr.bf16.mxu0 0
        %1425 = vmatpush1.bf16.msra.mxu0 0
        %1426 = vmatprep.subr.bf16.mxu0 0
        %1427 = vmatpush1.bf16.msra.mxu0 %v1408
        %1428 = vmatprep.subr.bf16.mxu0 0
        %1429 = vmatpush1.bf16.msra.mxu0 %v1407
        %1430 = vmatprep.subr.bf16.mxu0 0
        %1431 = vmatpush2.bf16.msra.mxu0 0
        %1432 = vmatprep.subr.bf16.mxu0 0
        %1433 = vmatpush2.bf16.msra.mxu0 0
        %1434 = vmatprep.subr.bf16.mxu0 0
        %1435 = vmatpush2.bf16.msra.mxu0 0
        %1436 = vmatprep.subr.bf16.mxu0 0
        %1437 = vmatpush2.bf16.msra.mxu0 0
        %1438 = vmatprep.subr.bf16.mxu0 0
        %1439 = vmatpush2.bf16.msra.mxu0 0
        %1440 = vmatprep.subr.bf16.mxu0 0
        %1441 = vmatpush2.bf16.msra.mxu0 0
        %1442 = vmatprep.subr.bf16.mxu0 0
        %1443 = vmatpush2.bf16.msra.mxu0 0
        %1444 = vmatprep.subr.bf16.mxu0 0
        %1445 = vmatpush2.bf16.msra.mxu0 0
        %1446 = vmatprep.mubr.bf16.mxu0 0
        %1447 = vmatmul.mubr.bf16.gmra.mxu0 %v1412
        %v1448 = vpop.f32.mrf.mxu0
        %v1449 = vadd.f32 %v1397, %v1448
        %v1450 = vpop.f32.mrf.mxu0
        %v1451 = vpop.f32.mrf.mxu0
        %v1452 = vpop.f32.mrf.mxu0
        %1453 = vdwg.mxu0
        %v1454 = vmax.f32 %v1449, 0.0
        %v1455 = vld [vmem:[%s944] sm:$0xf]
        %v1456 = vld [vmem:[%s944 + $0x4] sm:$0xf]
        %v1457 = vld [vmem:[%s944 + $0x8] sm:$0xf]
        %v1458 = vld [vmem:[%s944 + $0xc] sm:$0xf]
        %v1459 = vld [vmem:[%s944 + $0x10] sm:$0xf]
        %v1460 = vld [vmem:[%s944 + $0x14] sm:$0xf]
        %v1461 = vld [vmem:[%s944 + $0x18] sm:$0xf]
        %v1462 = vld [vmem:[%s944 + $0x1c] sm:$0xf]
        %v1463 = vpack.c.bf16 %v1454, %v1454
        %v1464 = vld [vmem:[%s947] sm:$0x1]
        %v1466 = vlaneseq
        %v1467 = vshrl.u32 %v1466, 7
        %v1468 = vsub.s32 0, %v1467
        %v1469 = vrot.slane %v1464, %v1468
        %v1479 = vunpack.c.l.b16 %v1455
        %v1480 = vunpack.c.l.b16 %v1456
        %v1481 = vunpack.c.l.b16 %v1457
        %v1482 = vunpack.c.l.b16 %v1458
        %v1483 = vunpack.c.l.b16 %v1459
        %v1484 = vunpack.c.l.b16 %v1460
        %v1485 = vunpack.c.l.b16 %v1461
        %v1486 = vunpack.c.l.b16 %v1462
        %v1487 = vpack.c.b16 %v1480, %v1479
        %v1488 = vpack.c.b16 %v1482, %v1481
        %v1489 = vpack.c.b16 %v1484, %v1483
        %v1490 = vpack.c.b16 %v1486, %v1485
        %vm1495 = vcmask 523264
        %v1497 = vsel %vm1495, %v1463, 0
        %1499 = vmatprep.subr.bf16.mxu0 0
        %1500 = vmatpush1.bf16.msra.mxu0 0
        %1501 = vmatprep.subr.bf16.mxu0 0
        %1502 = vmatpush1.bf16.msra.mxu0 0
        %1503 = vmatprep.subr.bf16.mxu0 0
        %1504 = vmatpush1.bf16.msra.mxu0 0
        %1505 = vmatprep.subr.bf16.mxu0 0
        %1506 = vmatpush1.bf16.msra.mxu0 0
        %1507 = vmatprep.subr.bf16.mxu0 0
        %1508 = vmatpush1.bf16.msra.mxu0 %v1490
        %1509 = vmatprep.subr.bf16.mxu0 0
        %1510 = vmatpush1.bf16.msra.mxu0 %v1489
        %1511 = vmatprep.subr.bf16.mxu0 0
        %1512 = vmatpush1.bf16.msra.mxu0 %v1488
        %1513 = vmatprep.subr.bf16.mxu0 0
        %1514 = vmatpush1.bf16.msra.mxu0 %v1487
        %1515 = vmatprep.subr.bf16.mxu0 0
        %1516 = vmatpush2.bf16.msra.mxu0 0
        %1517 = vmatprep.subr.bf16.mxu0 0
        %1518 = vmatpush2.bf16.msra.mxu0 0
        %1519 = vmatprep.subr.bf16.mxu0 0
        %1520 = vmatpush2.bf16.msra.mxu0 0
        %1521 = vmatprep.subr.bf16.mxu0 0
        %1522 = vmatpush2.bf16.msra.mxu0 0
        %1523 = vmatprep.subr.bf16.mxu0 0
        %1524 = vmatpush2.bf16.msra.mxu0 0
        %1525 = vmatprep.subr.bf16.mxu0 0
        %1526 = vmatpush2.bf16.msra.mxu0 0
        %1527 = vmatprep.subr.bf16.mxu0 0
        %1528 = vmatpush2.bf16.msra.mxu0 0
        %1529 = vmatprep.subr.bf16.mxu0 0
        %1530 = vmatpush2.bf16.msra.mxu0 0
        %1531 = vmatprep.mubr.bf16.mxu0 0
        %1532 = vmatmul.mubr.bf16.gmra.mxu0 %v1497
        %v1533 = vpop.f32.mrf.mxu0
        %v1534 = vadd.f32 %v1469, %v1533
        %v1535 = vpop.f32.mrf.mxu0
        %v1536 = vpop.f32.mrf.mxu0
        %v1537 = vpop.f32.mrf.mxu0
        %1538 = vdwg.mxu0
        %v1539 = vadd.f32 %v1386, %v1534
        %v1540 = vsel %vm996, %v1539, 0.0
        %1541 = vadd.xlane.f32.xlu0 %v1540
        %v1542 = vpop.xlane.xlu0 %1541
        %v1543 = vmul.f32 %v1542, %v1360
        %v1544 = vsub.f32 %v1539, %v1543
        %v1545 = vmul.f32 %v1544, %v1544
        %v1546 = vsel %vm996, %v1545, 0.0
        %1547 = vadd.xlane.f32.xlu0 %v1546
        %v1548 = vpop.xlane.xlu0 %1547
        %v1549 = vmul.f32 %v1548, %v1360
        %v1550 = vadd.f32 %v1549, 1e-05
        %v1551 = vrsqrt.pop %v1550
        %v1552 = vmul.f32 %v1544, %v1551
        %v1553 = vld [vmem:[%s956] sm:$0x1]
        %v1555 = vlaneseq
        %v1556 = vshrl.u32 %v1555, 7
        %v1557 = vsub.s32 0, %v1556
        %v1558 = vrot.slane %v1553, %v1557
        %v1560 = vmul.f32 %v1552, %v1558
        %v1561 = vld [vmem:[%s959] sm:$0x1]
        %v1563 = vlaneseq
        %v1564 = vshrl.u32 %v1563, 7
        %v1565 = vsub.s32 0, %v1564
        %v1566 = vrot.slane %v1561, %v1565
        %v1568 = vadd.f32 %v1560, %v1566
        %1569 = vst.msk [vmem:[#allocation2] sm:$0xff] %vm996, %v1568
        %p1570 = scmp.eq.s32.totalorder %s46, 1
        // Predicated region
        $region125: #{tpu_custom_call.1} parent=91 // pred_check
          %p1571 = pneg %p1570
        $region126: #{tpu_custom_call.1} parent=91 // pred_check_branch
          %1573 = sbr.rel (%p1571) target = $region128
        $region127: #{tpu_custom_call.1} parent=91 // pred_region
          %v1574 = vld [vmem:[#allocation2] sm:$0xff]
          %v1575 = vld [vmem:[%s787] sm:$0x1]
          %v1576 = vpack.c.bf16 %v1575, %v1575
          %v1577 = vpack.c.bf16 %v1574, %v1574
          %v1579 = vsel %vm1156, %v1576, 0
          %v1582 = vsel %vm1192, %v1577, 0
          %1584 = vmatprep.subr.bf16.mxu0 0
          %1585 = vmatpush1.bf16.msra.mxu0 0
          %1586 = vmatprep.subr.bf16.mxu0 0
          %1587 = vmatpush1.bf16.msra.mxu0 0
          %1588 = vmatprep.subr.bf16.mxu0 0
          %1589 = vmatpush1.bf16.msra.mxu0 0
          %1590 = vmatprep.subr.bf16.mxu0 0
          %1591 = vmatpush1.bf16.msra.mxu0 0
          %1592 = vmatprep.subr.bf16.mxu0 0
          %1593 = vmatpush1.bf16.msra.mxu0 0
          %1594 = vmatprep.subr.bf16.mxu0 0
          %1595 = vmatpush1.bf16.msra.mxu0 0
          %1596 = vmatprep.subr.bf16.mxu0 0
          %1597 = vmatpush1.bf16.msra.mxu0 0
          %1598 = vmatprep.subr.bf16.mxu0 0
          %1599 = vmatpush1.bf16.msra.mxu0 %v1582
          %1600 = vmatprep.subr.bf16.mxu0 0
          %1601 = vmatpush2.bf16.msra.mxu0 0
          %1602 = vmatprep.subr.bf16.mxu0 0
          %1603 = vmatpush2.bf16.msra.mxu0 0
          %1604 = vmatprep.subr.bf16.mxu0 0
          %1605 = vmatpush2.bf16.msra.mxu0 0
          %1606 = vmatprep.subr.bf16.mxu0 0
          %1607 = vmatpush2.bf16.msra.mxu0 0
          %1608 = vmatprep.subr.bf16.mxu0 0
          %1609 = vmatpush2.bf16.msra.mxu0 0
          %1610 = vmatprep.subr.bf16.mxu0 0
          %1611 = vmatpush2.bf16.msra.mxu0 0
          %1612 = vmatprep.subr.bf16.mxu0 0
          %1613 = vmatpush2.bf16.msra.mxu0 0
          %1614 = vmatprep.subr.bf16.mxu0 0
          %1615 = vmatpush2.bf16.msra.mxu0 0
          %1616 = vmatprep.mubr.bf16.mxu0 0
          %1617 = vmatmul.mubr.bf16.gmra.mxu0 %v1579
          %v1618 = vpop.f32.mrf.mxu0
          %v1619 = vadd.f32 0.0, %v1618
          %v1620 = vpop.f32.mrf.mxu0
          %v1621 = vpop.f32.mrf.mxu0
          %v1622 = vpop.f32.mrf.mxu0
          %1623 = vdwg.mxu0
          %v1624 = vld [vmem:[%s16] sm:$0xf]
          %v1625 = vld [vmem:[%s16 + $0x4] sm:$0xf]
          %v1626 = vld [vmem:[%s16 + $0x8] sm:$0xf]
          %v1627 = vld [vmem:[%s16 + $0xc] sm:$0xf]
          %v1628 = vpack.c.bf16 %v1619, %v1619
          %v1629 = vld [vmem:[%s17] sm:$0x1]
          %v1634 = vunpack.c.l.b16 %v1624
          %v1635 = vunpack.c.l.b16 %v1625
          %v1636 = vunpack.c.l.b16 %v1626
          %v1637 = vunpack.c.l.b16 %v1627
          %v1638 = vpack.c.b16 %v1635, %v1634
          %v1639 = vpack.c.b16 %v1637, %v1636
          %v1643 = vsel %vm996, %v1628, 0
          %1645 = vmatprep.subr.bf16.mxu0 0
          %1646 = vmatpush1.bf16.msra.mxu0 0
          %1647 = vmatprep.subr.bf16.mxu0 0
          %1648 = vmatpush1.bf16.msra.mxu0 0
          %1649 = vmatprep.subr.bf16.mxu0 0
          %1650 = vmatpush1.bf16.msra.mxu0 0
          %1651 = vmatprep.subr.bf16.mxu0 0
          %1652 = vmatpush1.bf16.msra.mxu0 0
          %1653 = vmatprep.subr.bf16.mxu0 0
          %1654 = vmatpush1.bf16.msra.mxu0 0
          %1655 = vmatprep.subr.bf16.mxu0 0
          %1656 = vmatpush1.bf16.msra.mxu0 0
          %1657 = vmatprep.subr.bf16.mxu0 0
          %1658 = vmatpush1.bf16.msra.mxu0 %v1639
          %1659 = vmatprep.subr.bf16.mxu0 0
          %1660 = vmatpush1.bf16.msra.mxu0 %v1638
          %1661 = vmatprep.subr.bf16.mxu0 0
          %1662 = vmatpush2.bf16.msra.mxu0 0
          %1663 = vmatprep.subr.bf16.mxu0 0
          %1664 = vmatpush2.bf16.msra.mxu0 0
          %1665 = vmatprep.subr.bf16.mxu0 0
          %1666 = vmatpush2.bf16.msra.mxu0 0
          %1667 = vmatprep.subr.bf16.mxu0 0
          %1668 = vmatpush2.bf16.msra.mxu0 0
          %1669 = vmatprep.subr.bf16.mxu0 0
          %1670 = vmatpush2.bf16.msra.mxu0 0
          %1671 = vmatprep.subr.bf16.mxu0 0
          %1672 = vmatpush2.bf16.msra.mxu0 0
          %1673 = vmatprep.subr.bf16.mxu0 0
          %1674 = vmatpush2.bf16.msra.mxu0 0
          %1675 = vmatprep.subr.bf16.mxu0 0
          %1676 = vmatpush2.bf16.msra.mxu0 0
          %1677 = vmatprep.mubr.bf16.mxu0 0
          %1678 = vmatmul.mubr.bf16.gmra.mxu0 %v1643
          %v1679 = vpop.f32.mrf.mxu0
          %v1680 = vadd.f32 %v1629, %v1679
          %v1681 = vpop.f32.mrf.mxu0
          %v1682 = vpop.f32.mrf.mxu0
          %v1683 = vpop.f32.mrf.mxu0
          %1684 = vdwg.mxu0
          %1685 = vst [vmem:[%s917] sm:$0x1] %v1680
        $region128: #{tpu_custom_call.1} parent=91 // pred_fallthru
          _
        %s1686 = sand.u32 %s514, 1
        %s1687 = scalar_lea.sflag [#allocation5], %s1686
        %s1688 = sand.u32 %s514, 1
        %s1689 = scalar_lea.vmem [#allocation13], %s1688
        %s1690 = sand.u32 %s542, 1
        %s1691 = scalar_lea.sflag [#allocation15], %s1690
        %s1692 = sand.u32 %s542, 1
        %s1693 = smul.addr %s1692, 8
        %s1694 = scalar_lea.vmem [#allocation14], %s1693
        // Predicated region
        $region129: #{tpu_custom_call.1} parent=91 // pred_check
          %p1695 = pneg %p524
        $region130: #{tpu_custom_call.1} parent=91 // pred_check_branch
          %1697 = sbr.rel (%p1695) target = $region132
        $region131: #{tpu_custom_call.1} parent=91 // pred_region
          %s1699 = ssub.s32 16, 16
          %1700 = vsyncadd %s1687, %s1699
          %s1701 = smul.addr %s45, 16
          %s1702 = scalar_lea.hbm %s18, %s1701
          %s1704 = sshll.u32 %s1689, 4
          %s1705 = int_to_ptr.vmem [resolvable:$true] %s1704
          %1707 = dma.vmem_to_hbm [thread:$0]  %s1705, 16, %s1702, %s1687
        $region132: #{tpu_custom_call.1} parent=91 // pred_fallthru
          _
        // Predicated region
        $region133: #{tpu_custom_call.1} parent=91 // pred_check
          %p1708 = pneg %p552
        $region134: #{tpu_custom_call.1} parent=91 // pred_check_branch
          %1710 = sbr.rel (%p1708) target = $region136
        $region135: #{tpu_custom_call.1} parent=91 // pred_region
          %s1712 = ssub.s32 128, 128
          %1713 = vsyncadd %s1691, %s1712
          %s1714 = smul.addr %s46, 2
          %s1715 = sadd.s32 %s45, %s1714
          %s1716 = smul.addr %s1715, 128
          %s1717 = scalar_lea.hbm %s19, %s1716
          %s1719 = sshll.u32 %s1694, 4
          %s1720 = int_to_ptr.vmem [resolvable:$true] %s1719
          %1722 = dma.vmem_to_hbm [thread:$0]  %s1720, 128, %s1717, %s1691
        $region136: #{tpu_custom_call.1} parent=91 // pred_fallthru
          _
      $region92: #{tpu_custom_call.1} parent=5 // pred_fallthru
        _
      %p1723 = scmp.le.s32.totalorder 2, %s36
      // Predicated region
      $region137: #{tpu_custom_call.1} parent=5 // pred_check
        %p1724 = pneg %p1723
      $region138: #{tpu_custom_call.1} parent=5 // pred_check_branch
        %1726 = sbr.rel (%p1724) target = $region140
      $region139: #{tpu_custom_call.1} parent=5 // pred_region
        %s1727 = ssub.s32 %s36, 2
        // Predicated region
        $region141: #{tpu_custom_call.1} parent=139 // pred_check
          %p1728 = pneg %p530
        $region142: #{tpu_custom_call.1} parent=139 // pred_check_branch
          %1730 = sbr.rel (%p1728) target = $region144
        $region143: #{tpu_custom_call.1} parent=139 // pred_region
          %s1731 = sand.u32 %s515, 1
          %s1732 = scalar_lea.sflag [#allocation5], %s1731
          %s1733 = sand.u32 %s515, 1
          %s1734 = scalar_lea.vmem [#allocation13], %s1733
          %1735 = dma.done %s1732, 16
        $region144: #{tpu_custom_call.1} parent=139 // pred_fallthru
          _
        // Predicated region
        $region145: #{tpu_custom_call.1} parent=139 // pred_check
          %p1736 = pneg %p558
        $region146: #{tpu_custom_call.1} parent=139 // pred_check_branch
          %1738 = sbr.rel (%p1736) target = $region148
        $region147: #{tpu_custom_call.1} parent=139 // pred_region
          %s1739 = sand.u32 %s543, 1
          %s1740 = scalar_lea.sflag [#allocation15], %s1739
          %s1741 = sand.u32 %s543, 1
          %s1742 = smul.addr %s1741, 8
          %s1743 = scalar_lea.vmem [#allocation14], %s1742
          %1744 = dma.done %s1740, 128
        $region148: #{tpu_custom_call.1} parent=139 // pred_fallthru
          _
      $region140: #{tpu_custom_call.1} parent=5 // pred_fallthru
        _
    $region6: #{tpu_custom_call.1} parent=1 // loop_footer
      %s40 = sadd.s32 1, %s36
    $region7: #{tpu_custom_call.1} parent=1 // loop_footer_branch
      %35 = sbr.rel target = $region3
    $region8: #{tpu_custom_call.1} parent=1 // loop_exit
      _
    %1745 = vsyncpa [#allocation4], 1
    %s1746 = scalar_lea.sflag [#allocation4], 1
    %1747 = vsyncpa %s1746, 1
    %1748 = vsyncpa [#allocation7], 1
    %1749 = vsyncpa [#allocation5], 1
    %s1750 = scalar_lea.sflag [#allocation5], 1
    %1751 = vsyncpa %s1750, 1
    %1752 = vsyncpa [#allocation15], 1
    %s1753 = scalar_lea.sflag [#allocation15], 1
    %1754 = vsyncpa %s1753, 1

</llo_original>
